<compile_context>
chip_gen: v7x
topology: tpu7x:2x2x1
jax: 0.10.0
libtpu: 0.0.40
codegen_flags: <defaults>
</compile_context>

<pallas_src>
import functools

import jax
import jax.numpy as jnp
import numpy as np
from jax.experimental import pallas as pl
from jax.experimental.pallas import tpu as pltpu


def _lstm_seq_kernel(x_ref,            # VMEM (Tc, H)      f32  embedded chars (this chunk)
                     w_ref,            # VMEM (L, 2H, 4H)  bf16 fused [W_ih^T; W_hh^T], i/f/o cols pre-scaled 0.5
                     b_ref,            # VMEM (L, 1, 4H)   f32  b_ih + b_hh, i/f/o cols pre-scaled 0.5
                     w_dec_ref,        # VMEM (H, O_pad)   bf16 decoder weight (lane-padded)
                     b_dec_ref,        # VMEM (1, O_pad)   f32  decoder bias (lane-padded)
                     h0_ref, c0_ref,   # VMEM (L, 1, H)    f32  initial states
                     logits_ref,       # VMEM (Tc, O_pad)  f32  per-chunk logits block
                     h_out_ref,        # VMEM (L, 1, H)    f32  carried hidden state (resident)
                     c_out_ref,        # VMEM (L, 1, H)    f32  carried cell state (resident)
                     *, hidden_size, num_layers, chunk_steps, total_steps):
    H = hidden_size
    L = num_layers
    Tc = chunk_steps
    chunk = pl.program_id(0)

    # Initialize the resident state carry once, before the first chunk.
    @pl.when(chunk == 0)
    def _():
        h_out_ref[...] = h0_ref[...]
        c_out_ref[...] = c0_ref[...]

    # Hoisted loop invariants: weight/bias vregs + the gate-lane select mask
    # (g-gate lanes keep tanh; i/f/o lanes get sigmoid via 0.5*tanh + 0.5).
    ws = [w_ref[l] for l in range(L)]                 # (2H, 4H) bf16 each
    bs = [b_ref[l] for l in range(L)]                 # (1, 4H)  f32 each
    w_dec = w_dec_ref[...]                            # (H, O_pad) bf16
    b_dec = b_dec_ref[...]                            # (1, O_pad) f32
    lane = jax.lax.broadcasted_iota(jnp.int32, (1, 4 * H), 1)
    is_g = jnp.logical_and(lane >= 2 * H, lane < 3 * H)

    def run_steps(n_steps):
        # Load the carried state into vregs once per chunk.
        hs = [h_out_ref[l] for l in range(L)]
        cs = [c_out_ref[l] for l in range(L)]

        def step(t, carry):
            hs, cs = carry
            x = x_ref[pl.ds(t, 1), :]                 # (1, H) f32
            hs_new, cs_new = [], []
            for l in range(L):                        # static unroll over layers
                xh = jnp.concatenate([x, hs[l]], axis=-1).astype(jnp.bfloat16)
                gates = (jnp.dot(xh, ws[l], preferred_element_type=jnp.float32)
                         + bs[l])                     # (1, 4H) f32, order i,f,g,o
                t_all = jnp.tanh(gates)               # single EUP pass per layer
                act = jnp.where(is_g, t_all, 0.5 * t_all + 0.5)
                i_g = act[:, 0 * H:1 * H]
                f_g = act[:, 1 * H:2 * H]
                g_g = act[:, 2 * H:3 * H]
                o_g = act[:, 3 * H:4 * H]
                c_new = f_g * cs[l] + i_g * g_g       # f32 state update
                h_new = o_g * jnp.tanh(c_new)
                hs_new.append(h_new)
                cs_new.append(c_new)
                x = h_new                             # feed next layer
            # Decoder projection (off the recurrence critical path).
            logits = (jnp.dot(x.astype(jnp.bfloat16), w_dec,
                              preferred_element_type=jnp.float32) + b_dec)
            logits_ref[pl.ds(t, 1), :] = logits       # (1, O_pad) row store
            return hs_new, cs_new

        hs, cs = jax.lax.fori_loop(0, n_steps, step, (hs, cs),
                                   unroll=bool(n_steps <= 16))
        # Write the carried state back to the resident output refs once per chunk.
        for l in range(L):
            h_out_ref[l] = hs[l]
            c_out_ref[l] = cs[l]

    rem = total_steps % Tc            # static: ragged tail length of the last chunk
    if rem == 0:
        run_steps(Tc)
    else:
        is_last = chunk == pl.num_programs(0) - 1

        @pl.when(jnp.logical_not(is_last))
        def _():
            run_steps(Tc)

        @pl.when(is_last)
        def _():
            run_steps(rem)


def lstm_forward_seq(params, char_idxs, hidden, output_size, *, max_chunk=2048):
    """Run a whole character sequence through the stacked LSTM + decoder in ONE
    pallas_call.  Equivalent to calling the PyTorch module's forward() once per
    character while threading `hidden` through.

    char_idxs: (T,) int32.
    hidden:    (h, c), each (num_layers, 1, hidden_size) f32.
    Returns (logits of shape (T, output_size), (h_new, c_new)).
    """
    assert max_chunk % 8 == 0
    emb, w_fused, b, w_dec, b_dec = params
    h0, c0 = hidden
    L, _, H = h0.shape
    T = int(char_idxs.shape[0])
    O_pad = w_dec.shape[1]

    # Hoist the embedding gather off the recurrence (x_t doesn't depend on state).
    x_all = jnp.take(emb, char_idxs.astype(jnp.int32), axis=0)   # (T, H) f32

    if T <= max_chunk:
        Tc, num_chunks, T_pad = T, 1, T
    else:
        Tc = max_chunk
        num_chunks = -(-T // Tc)
        T_pad = num_chunks * Tc
        x_all = jnp.pad(x_all, ((0, T_pad - T), (0, 0)))

    kernel = functools.partial(_lstm_seq_kernel, hidden_size=H, num_layers=L,
                               chunk_steps=Tc, total_steps=T)

    grid_spec = pltpu.PrefetchScalarGridSpec(
        num_scalar_prefetch=0,
        grid=(num_chunks,),
        in_specs=[
            # Embedded inputs are blocked per chunk; everything else uses a
            # constant index_map so it stays VMEM-resident across all chunks.
            pl.BlockSpec((Tc, H), lambda c: (c, 0)),
            pl.BlockSpec(w_fused.shape, lambda c: (0, 0, 0)),
            pl.BlockSpec(b.shape, lambda c: (0, 0, 0)),
            pl.BlockSpec(w_dec.shape, lambda c: (0, 0)),
            pl.BlockSpec(b_dec.shape, lambda c: (0, 0)),
            pl.BlockSpec(h0.shape, lambda c: (0, 0, 0)),
            pl.BlockSpec(c0.shape, lambda c: (0, 0, 0)),
        ],
        out_specs=(
            pl.BlockSpec((Tc, O_pad), lambda c: (c, 0)),    # per-chunk logits
            pl.BlockSpec(h0.shape, lambda c: (0, 0, 0)),    # carried h (resident)
            pl.BlockSpec(c0.shape, lambda c: (0, 0, 0)),    # carried c (resident)
        ),
    )

    logits_pad, h_new, c_new = pl.pallas_call(
        kernel,
        grid_spec=grid_spec,
        out_shape=(
            jax.ShapeDtypeStruct((T_pad, O_pad), jnp.float32),
            jax.ShapeDtypeStruct((L, 1, H), jnp.float32),
            jax.ShapeDtypeStruct((L, 1, H), jnp.float32),
        ),
        compiler_params=pltpu.CompilerParams(
            dimension_semantics=("arbitrary",)),   # time is a true recurrence
    )(x_all, w_fused, b, w_dec, b_dec, h0, c0)

    return logits_pad[:T, :output_size], (h_new, c_new)


def lstm_forward(params, char_idx, hidden, output_size):
    """Exact analogue of the PyTorch module's single-character forward()."""
    idxs = jnp.reshape(char_idx, (1,)).astype(jnp.int32)
    logits, hidden = lstm_forward_seq(params, idxs, hidden, output_size)
    return logits, hidden   # logits: (1, output_size)


def init_params(key, input_size, hidden_size, output_size, num_layers):
    """Deterministic parameter init mirroring the PyTorch module's shapes, then
    repacked into the kernel layout: fused bf16 gate weights with the sigmoid
    half-angle scale (0.5) folded into the i/f/o columns, and a zero-padded
    lane-dense decoder."""
    H, L, O = hidden_size, num_layers, output_size
    O_pad = max(128, ((O + 127) // 128) * 128)
    k = jax.random.split(key, 8)
    bound = 1.0 / np.sqrt(H)
    uni = lambda kk, shape: jax.random.uniform(kk, shape, jnp.float32,
                                               -bound, bound)

    emb = jax.random.normal(k[0], (input_size, H), jnp.float32)   # Embedding
    w_ih = uni(k[1], (L, 4 * H, H))                               # per-layer W_ih
    w_hh = uni(k[2], (L, 4 * H, H))                               # per-layer W_hh
    b_ih = uni(k[3], (L, 4 * H))
    b_hh = uni(k[4], (L, 4 * H))
    w_dec = uni(k[5], (O, H))                                     # Linear weight
    b_dec = uni(k[6], (O,))                                       # Linear bias

    # Fuse gate weights: concat([x, h]) @ [W_ih^T; W_hh^T] -> (L, 2H, 4H).
    w_fused = jnp.concatenate(
        [jnp.transpose(w_ih, (0, 2, 1)), jnp.transpose(w_hh, (0, 2, 1))],
        axis=1)
    b_sum = (b_ih + b_hh).reshape(L, 1, 4 * H)

    # Fold the sigmoid half-angle scale into the i/f/o gate columns so the
    # kernel needs a single tanh per layer: sigmoid(z) = 0.5*tanh(z/2) + 0.5.
    # Scaling by 0.5 is exact (power of two), so this is mathematically the
    # same LSTM gate math as PyTorch.
    col = np.arange(4 * H)
    ifo_cols = (col < 2 * H) | (col >= 3 * H)                     # i, f, o lanes
    scale = jnp.asarray(np.where(ifo_cols, 0.5, 1.0), jnp.float32)
    w_fused = (w_fused * scale).astype(jnp.bfloat16)
    b_sum = (b_sum * scale).astype(jnp.float32)

    # Decoder: transpose and zero-pad the output dim to a full 128-lane width.
    w_dec_t = jnp.zeros((H, O_pad), jnp.float32).at[:, :O].set(w_dec.T)
    w_dec_t = w_dec_t.astype(jnp.bfloat16)
    b_dec_p = jnp.zeros((1, O_pad), jnp.float32).at[0, :O].set(b_dec)

    return (emb, w_fused, b_sum, w_dec_t, b_dec_p)


def lstm_forward_seq_ref(params, char_idxs, hidden, output_size):
    """Pure-JAX reference with identical math (bf16 MXU-input casts + the
    folded-0.5 sigmoid-via-tanh formulation)."""
    emb, w_fused, b, w_dec, b_dec = params
    L, _, H = hidden[0].shape
    h = [hidden[0][l] for l in range(L)]
    c = [hidden[1][l] for l in range(L)]
    logits_all = []
    for t in range(int(char_idxs.shape[0])):
        x = emb[char_idxs[t]].reshape(1, H)
        for l in range(L):
            xh = jnp.concatenate([x, h[l]], axis=-1).astype(jnp.bfloat16)
            gates = jnp.dot(xh, w_fused[l],
                            preferred_element_type=jnp.float32) + b[l]
            i = 0.5 * jnp.tanh(gates[:, 0 * H:1 * H]) + 0.5
            f = 0.5 * jnp.tanh(gates[:, 1 * H:2 * H]) + 0.5
            g = jnp.tanh(gates[:, 2 * H:3 * H])
            o = 0.5 * jnp.tanh(gates[:, 3 * H:4 * H]) + 0.5
            c[l] = f * c[l] + i * g
            h[l] = o * jnp.tanh(c[l])
            x = h[l]
        logits = jnp.dot(x.astype(jnp.bfloat16), w_dec,
                         preferred_element_type=jnp.float32) + b_dec
        logits_all.append(logits[:, :output_size])
    return jnp.concatenate(logits_all, axis=0), (jnp.stack(h), jnp.stack(c))


if __name__ == "__main__":
    input_size = 16     # vocab size for the embedding
    hidden_size = 32
    output_size = 16
    num_layers = 2
    seq_len = 8

    key = jax.random.PRNGKey(0)
    params = init_params(key, input_size, hidden_size, output_size, num_layers)

    # init_hidden(): zeros of shape (num_layers, 1, hidden_size)
    h0 = jnp.zeros((num_layers, 1, hidden_size), jnp.float32)
    c0 = jnp.zeros((num_layers, 1, hidden_size), jnp.float32)

    # A small deterministic character sequence.
    char_idxs = (jnp.arange(seq_len, dtype=jnp.int32) * 5 + 3) % input_size

    # Whole-sequence run: one pallas_call, recurrence inside the kernel.
    logits, (h1, c1) = lstm_forward_seq(params, char_idxs, (h0, c0),
                                        output_size)
    jax.block_until_ready((logits, h1, c1))

    # Sanity check against a pure-JAX reference (same bf16/f32/tanh recipe).
    logits_r, (h1_r, c1_r) = lstm_forward_seq_ref(params, char_idxs,
                                                  (h0, c0), output_size)
    np.testing.assert_allclose(np.asarray(logits), np.asarray(logits_r),
                               rtol=1e-4, atol=1e-4)
    np.testing.assert_allclose(np.asarray(h1), np.asarray(h1_r),
                               rtol=1e-4, atol=1e-4)
    np.testing.assert_allclose(np.asarray(c1), np.asarray(c1_r),
                               rtol=1e-4, atol=1e-4)

    assert logits.shape == (seq_len, output_size)
    assert h1.shape == (num_layers, 1, hidden_size)
    assert c1.shape == (num_layers, 1, hidden_size)

    # Single-character forward() (exact PyTorch-module semantics) also works.
    logits1, (h_s, c_s) = lstm_forward(params, char_idxs[0], (h0, c0),
                                       output_size)
    jax.block_until_ready((logits1, h_s, c_s))
    np.testing.assert_allclose(np.asarray(logits1), np.asarray(logits[:1]),
                               rtol=1e-4, atol=1e-4)
    assert logits1.shape == (1, output_size)

    # Exercise the multi-chunk + ragged-tail path (bounded-VMEM mode for long
    # sequences, e.g. on v7x): T=20 with chunk size 8 -> chunks of 8, 8, 4.
    seq_len2 = 20
    char_idxs2 = (jnp.arange(seq_len2, dtype=jnp.int32) * 7 + 1) % input_size
    logits2, (h2, c2) = lstm_forward_seq(params, char_idxs2, (h0, c0),
                                         output_size, max_chunk=8)
    jax.block_until_ready((logits2, h2, c2))
    logits2_r, (h2_r, c2_r) = lstm_forward_seq_ref(params, char_idxs2,
                                                   (h0, c0), output_size)
    np.testing.assert_allclose(np.asarray(logits2), np.asarray(logits2_r),
                               rtol=1e-4, atol=1e-4)
    np.testing.assert_allclose(np.asarray(h2), np.asarray(h2_r),
                               rtol=1e-4, atol=1e-4)
    np.testing.assert_allclose(np.asarray(c2), np.asarray(c2_r),
                               rtol=1e-4, atol=1e-4)
    assert logits2.shape == (seq_len2, output_size)

    # NOTE: batching independent sequences (filling MXU rows / the second v7x
    # TensorCore via a leading "parallel" grid axis) would raise throughput but
    # is intentionally not done to preserve the module's batch=1 semantics.

    print("KERNEL_OK")
</pallas_src>

<mosaic_0001>
module attributes {stable_mosaic.version = 11 : i64} {
  func.func @_lstm_seq_kernel(%arg0: i32, %arg1: memref<8x32xf32, #tpu.memory_space<vmem>>, %arg2: memref<2x64x128xbf16, #tpu.memory_space<vmem>>, %arg3: memref<2x1x128xf32, #tpu.memory_space<vmem>>, %arg4: memref<32x128xbf16, #tpu.memory_space<vmem>>, %arg5: memref<1x128xf32, #tpu.memory_space<vmem>>, %arg6: memref<2x1x32xf32, #tpu.memory_space<vmem>>, %arg7: memref<2x1x32xf32, #tpu.memory_space<vmem>>, %arg8: memref<8x128xf32, #tpu.memory_space<vmem>>, %arg9: memref<2x1x32xf32, #tpu.memory_space<vmem>>, %arg10: memref<2x1x32xf32, #tpu.memory_space<vmem>>) attributes {dimension_semantics = [#tpu.dimension_semantics<arbitrary>], iteration_bounds = array<i64: 1>, scalar_prefetch = 0 : i64, scratch_operands = 0 : i64, tpu.core_type = #tpu.core_type<tc>, window_params = [{transform_indices = @transform_0, window_bounds = array<i64: 8, 32>}, {pipeline_mode = #tpu.pipeline_mode<synchronous>, transform_indices = @transform_1, window_bounds = array<i64: 2, 64, 128>}, {pipeline_mode = #tpu.pipeline_mode<synchronous>, transform_indices = @transform_2, window_bounds = array<i64: 2, 1, 128>}, {pipeline_mode = #tpu.pipeline_mode<synchronous>, transform_indices = @transform_3, window_bounds = array<i64: 32, 128>}, {pipeline_mode = #tpu.pipeline_mode<synchronous>, transform_indices = @transform_4, window_bounds = array<i64: 1, 128>}, {pipeline_mode = #tpu.pipeline_mode<synchronous>, transform_indices = @transform_5, window_bounds = array<i64: 2, 1, 32>}, {pipeline_mode = #tpu.pipeline_mode<synchronous>, transform_indices = @transform_6, window_bounds = array<i64: 2, 1, 32>}, {transform_indices = @transform_7, window_bounds = array<i64: 8, 128>}, {pipeline_mode = #tpu.pipeline_mode<synchronous>, transform_indices = @transform_8, window_bounds = array<i64: 2, 1, 32>}, {pipeline_mode = #tpu.pipeline_mode<synchronous>, transform_indices = @transform_9, window_bounds = array<i64: 2, 1, 32>}]} {
    %c0_i32 = arith.constant 0 : i32
    %0 = arith.cmpi eq, %arg0, %c0_i32 : i32
    %1 = arith.extui %0 : i1 to i32
    %c0_i32_0 = arith.constant 0 : i32
    %2 = arith.cmpi ne, %1, %c0_i32_0 : i32
    scf.if %2 {
      %c0_111 = arith.constant 0 : index
      %c0_112 = arith.constant 0 : index
      %c0_113 = arith.constant 0 : index
      %399 = vector.load %arg6[%c0_111, %c0_112, %c0_113] : memref<2x1x32xf32, #tpu.memory_space<vmem>>, vector<2x1x32xf32>
      %c0_114 = arith.constant 0 : index
      %c0_115 = arith.constant 0 : index
      %c0_116 = arith.constant 0 : index
      %400 = vector.load %arg9[%c0_114, %c0_115, %c0_116] : memref<2x1x32xf32, #tpu.memory_space<vmem>>, vector<2x1x32xf32>
      tpu.vector_store %arg9[%c0_114, %c0_115, %c0_116], %399 {strides = array<i32>} : memref<2x1x32xf32, #tpu.memory_space<vmem>>, vector<2x1x32xf32>,
      %c0_117 = arith.constant 0 : index
      %c0_118 = arith.constant 0 : index
      %c0_119 = arith.constant 0 : index
      %401 = vector.load %arg7[%c0_117, %c0_118, %c0_119] : memref<2x1x32xf32, #tpu.memory_space<vmem>>, vector<2x1x32xf32>
      %c0_120 = arith.constant 0 : index
      %c0_121 = arith.constant 0 : index
      %c0_122 = arith.constant 0 : index
      %402 = vector.load %arg10[%c0_120, %c0_121, %c0_122] : memref<2x1x32xf32, #tpu.memory_space<vmem>>, vector<2x1x32xf32>
      tpu.vector_store %arg10[%c0_120, %c0_121, %c0_122], %401 {strides = array<i32>} : memref<2x1x32xf32, #tpu.memory_space<vmem>>, vector<2x1x32xf32>,
    } else {
    }
    %c0 = arith.constant 0 : index
    %c0_1 = arith.constant 0 : index
    %c0_2 = arith.constant 0 : index
    %3 = vector.load %arg2[%c0, %c0_1, %c0_2] : memref<2x64x128xbf16, #tpu.memory_space<vmem>>, vector<1x64x128xbf16>
    %4 = vector.shape_cast %3 : vector<1x64x128xbf16> to vector<64x128xbf16>
    %c1 = arith.constant 1 : index
    %c0_3 = arith.constant 0 : index
    %c0_4 = arith.constant 0 : index
    %5 = vector.load %arg2[%c1, %c0_3, %c0_4] : memref<2x64x128xbf16, #tpu.memory_space<vmem>>, vector<1x64x128xbf16>
    %6 = vector.shape_cast %5 : vector<1x64x128xbf16> to vector<64x128xbf16>
    %c0_5 = arith.constant 0 : index
    %c0_6 = arith.constant 0 : index
    %c0_7 = arith.constant 0 : index
    %7 = vector.load %arg3[%c0_5, %c0_6, %c0_7] : memref<2x1x128xf32, #tpu.memory_space<vmem>>, vector<1x1x128xf32>
    %8 = vector.shape_cast %7 : vector<1x1x128xf32> to vector<1x128xf32>
    %c1_8 = arith.constant 1 : index
    %c0_9 = arith.constant 0 : index
    %c0_10 = arith.constant 0 : index
    %9 = vector.load %arg3[%c1_8, %c0_9, %c0_10] : memref<2x1x128xf32, #tpu.memory_space<vmem>>, vector<1x1x128xf32>
    %10 = vector.shape_cast %9 : vector<1x1x128xf32> to vector<1x128xf32>
    %c0_11 = arith.constant 0 : index
    %c0_12 = arith.constant 0 : index
    %11 = vector.load %arg4[%c0_11, %c0_12] : memref<32x128xbf16, #tpu.memory_space<vmem>>, vector<32x128xbf16>
    %c0_13 = arith.constant 0 : index
    %c0_14 = arith.constant 0 : index
    %12 = vector.load %arg5[%c0_13, %c0_14] : memref<1x128xf32, #tpu.memory_space<vmem>>, vector<1x128xf32>
    %13 = tpu.iota {dimensions = array<i32: 1>} : vector<1x128xi32>
    %c64_i32 = arith.constant 64 : i32
    %14 = vector.broadcast %c64_i32 : i32 to vector<1x128xi32>
    %15 = arith.cmpi sge, %13, %14 : vector<1x128xi32>
    %c96_i32 = arith.constant 96 : i32
    %16 = vector.broadcast %c96_i32 : i32 to vector<1x128xi32>
    %17 = arith.cmpi slt, %13, %16 : vector<1x128xi32>
    %18 = arith.andi %15, %17 : vector<1x128xi1>
    %c0_15 = arith.constant 0 : index
    %c0_16 = arith.constant 0 : index
    %c0_17 = arith.constant 0 : index
    %19 = vector.load %arg9[%c0_15, %c0_16, %c0_17] : memref<2x1x32xf32, #tpu.memory_space<vmem>>, vector<1x1x32xf32>
    %20 = vector.shape_cast %19 : vector<1x1x32xf32> to vector<1x32xf32>
    %c1_18 = arith.constant 1 : index
    %c0_19 = arith.constant 0 : index
    %c0_20 = arith.constant 0 : index
    %21 = vector.load %arg9[%c1_18, %c0_19, %c0_20] : memref<2x1x32xf32, #tpu.memory_space<vmem>>, vector<1x1x32xf32>
    %22 = vector.shape_cast %21 : vector<1x1x32xf32> to vector<1x32xf32>
    %c0_21 = arith.constant 0 : index
    %c0_22 = arith.constant 0 : index
    %c0_23 = arith.constant 0 : index
    %23 = vector.load %arg10[%c0_21, %c0_22, %c0_23] : memref<2x1x32xf32, #tpu.memory_space<vmem>>, vector<1x1x32xf32>
    %24 = vector.shape_cast %23 : vector<1x1x32xf32> to vector<1x32xf32>
    %c1_24 = arith.constant 1 : index
    %c0_25 = arith.constant 0 : index
    %c0_26 = arith.constant 0 : index
    %25 = vector.load %arg10[%c1_24, %c0_25, %c0_26] : memref<2x1x32xf32, #tpu.memory_space<vmem>>, vector<1x1x32xf32>
    %26 = vector.shape_cast %25 : vector<1x1x32xf32> to vector<1x32xf32>
    %c0_i32_27 = arith.constant 0 : i32
    %27 = arith.index_cast %c0_i32_27 : i32 to index
    %c0_28 = arith.constant 0 : index
    %28 = vector.load %arg1[%27, %c0_28] : memref<8x32xf32, #tpu.memory_space<vmem>>, vector<1x32xf32>
    %29 = tpu.concatenate %28, %20 in 1 : vector<1x32xf32>, vector<1x32xf32> -> vector<1x64xf32>
    %30 = arith.truncf %29 : vector<1x64xf32> to vector<1x64xbf16>
    %cst = arith.constant dense<0.000000e+00> : vector<1x128xf32>
    %31 = tpu.matmul %30, %4, %cst {dimension_numbers = #tpu.dot_dimension_numbers<[1], [0], [0], [1], [0, 0, 1, 1], [], []>} : vector<1x64xbf16>, vector<64x128xbf16>, vector<1x128xf32> -> vector<1x128xf32>
    %32 = arith.addf %31, %8 : vector<1x128xf32>
    %33 = math.tanh %32 : vector<1x128xf32>
    %cst_29 = arith.constant 5.000000e-01 : f32
    %34 = vector.broadcast %cst_29 : f32 to vector<1x128xf32>
    %35 = arith.mulf %34, %33 : vector<1x128xf32>
    %cst_30 = arith.constant 5.000000e-01 : f32
    %36 = vector.broadcast %cst_30 : f32 to vector<1x128xf32>
    %37 = arith.addf %35, %36 : vector<1x128xf32>
    %38 = arith.select %18, %33, %37 : vector<1x128xi1>, vector<1x128xf32>
    %39 = vector.extract_strided_slice %38 {offsets = [0, 0], sizes = [1, 32], strides = [1, 1]} : vector<1x128xf32> to vector<1x32xf32>
    %40 = vector.extract_strided_slice %38 {offsets = [0, 32], sizes = [1, 32], strides = [1, 1]} : vector<1x128xf32> to vector<1x32xf32>
    %41 = vector.extract_strided_slice %38 {offsets = [0, 64], sizes = [1, 32], strides = [1, 1]} : vector<1x128xf32> to vector<1x32xf32>
    %42 = vector.extract_strided_slice %38 {offsets = [0, 96], sizes = [1, 32], strides = [1, 1]} : vector<1x128xf32> to vector<1x32xf32>
    %43 = arith.mulf %40, %24 : vector<1x32xf32>
    %44 = arith.mulf %39, %41 : vector<1x32xf32>
    %45 = arith.addf %43, %44 : vector<1x32xf32>
    %46 = math.tanh %45 : vector<1x32xf32>
    %47 = arith.mulf %42, %46 : vector<1x32xf32>
    %48 = tpu.concatenate %47, %22 in 1 : vector<1x32xf32>, vector<1x32xf32> -> vector<1x64xf32>
    %49 = arith.truncf %48 : vector<1x64xf32> to vector<1x64xbf16>
    %cst_31 = arith.constant dense<0.000000e+00> : vector<1x128xf32>
    %50 = tpu.matmul %49, %6, %cst_31 {dimension_numbers = #tpu.dot_dimension_numbers<[1], [0], [0], [1], [0, 0, 1, 1], [], []>} : vector<1x64xbf16>, vector<64x128xbf16>, vector<1x128xf32> -> vector<1x128xf32>
    %51 = arith.addf %50, %10 : vector<1x128xf32>
    %52 = math.tanh %51 : vector<1x128xf32>
    %cst_32 = arith.constant 5.000000e-01 : f32
    %53 = vector.broadcast %cst_32 : f32 to vector<1x128xf32>
    %54 = arith.mulf %53, %52 : vector<1x128xf32>
    %cst_33 = arith.constant 5.000000e-01 : f32
    %55 = vector.broadcast %cst_33 : f32 to vector<1x128xf32>
    %56 = arith.addf %54, %55 : vector<1x128xf32>
    %57 = arith.select %18, %52, %56 : vector<1x128xi1>, vector<1x128xf32>
    %58 = vector.extract_strided_slice %57 {offsets = [0, 0], sizes = [1, 32], strides = [1, 1]} : vector<1x128xf32> to vector<1x32xf32>
    %59 = vector.extract_strided_slice %57 {offsets = [0, 32], sizes = [1, 32], strides = [1, 1]} : vector<1x128xf32> to vector<1x32xf32>
    %60 = vector.extract_strided_slice %57 {offsets = [0, 64], sizes = [1, 32], strides = [1, 1]} : vector<1x128xf32> to vector<1x32xf32>
    %61 = vector.extract_strided_slice %57 {offsets = [0, 96], sizes = [1, 32], strides = [1, 1]} : vector<1x128xf32> to vector<1x32xf32>
    %62 = arith.mulf %59, %26 : vector<1x32xf32>
    %63 = arith.mulf %58, %60 : vector<1x32xf32>
    %64 = arith.addf %62, %63 : vector<1x32xf32>
    %65 = math.tanh %64 : vector<1x32xf32>
    %66 = arith.mulf %61, %65 : vector<1x32xf32>
    %67 = arith.truncf %66 : vector<1x32xf32> to vector<1x32xbf16>
    %cst_34 = arith.constant dense<0.000000e+00> : vector<1x128xf32>
    %68 = tpu.matmul %67, %11, %cst_34 {dimension_numbers = #tpu.dot_dimension_numbers<[1], [0], [0], [1], [0, 0, 1, 1], [], []>} : vector<1x32xbf16>, vector<32x128xbf16>, vector<1x128xf32> -> vector<1x128xf32>
    %69 = arith.addf %68, %12 : vector<1x128xf32>
    %70 = arith.index_cast %c0_i32_27 : i32 to index
    %c0_35 = arith.constant 0 : index
    %71 = vector.load %arg8[%70, %c0_35] : memref<8x128xf32, #tpu.memory_space<vmem>>, vector<1x128xf32>
    tpu.vector_store %arg8[%70, %c0_35], %69 {strides = array<i32>} : memref<8x128xf32, #tpu.memory_space<vmem>>, vector<1x128xf32>,
    %c1_i32 = arith.constant 1 : i32
    %72 = arith.index_cast %c1_i32 : i32 to index
    %c0_36 = arith.constant 0 : index
    %73 = vector.load %arg1[%72, %c0_36] : memref<8x32xf32, #tpu.memory_space<vmem>>, vector<1x32xf32>
    %74 = tpu.concatenate %73, %47 in 1 : vector<1x32xf32>, vector<1x32xf32> -> vector<1x64xf32>
    %75 = arith.truncf %74 : vector<1x64xf32> to vector<1x64xbf16>
    %cst_37 = arith.constant dense<0.000000e+00> : vector<1x128xf32>
    %76 = tpu.matmul %75, %4, %cst_37 {dimension_numbers = #tpu.dot_dimension_numbers<[1], [0], [0], [1], [0, 0, 1, 1], [], []>} : vector<1x64xbf16>, vector<64x128xbf16>, vector<1x128xf32> -> vector<1x128xf32>
    %77 = arith.addf %76, %8 : vector<1x128xf32>
    %78 = math.tanh %77 : vector<1x128xf32>
    %cst_38 = arith.constant 5.000000e-01 : f32
    %79 = vector.broadcast %cst_38 : f32 to vector<1x128xf32>
    %80 = arith.mulf %79, %78 : vector<1x128xf32>
    %cst_39 = arith.constant 5.000000e-01 : f32
    %81 = vector.broadcast %cst_39 : f32 to vector<1x128xf32>
    %82 = arith.addf %80, %81 : vector<1x128xf32>
    %83 = arith.select %18, %78, %82 : vector<1x128xi1>, vector<1x128xf32>
    %84 = vector.extract_strided_slice %83 {offsets = [0, 0], sizes = [1, 32], strides = [1, 1]} : vector<1x128xf32> to vector<1x32xf32>
    %85 = vector.extract_strided_slice %83 {offsets = [0, 32], sizes = [1, 32], strides = [1, 1]} : vector<1x128xf32> to vector<1x32xf32>
    %86 = vector.extract_strided_slice %83 {offsets = [0, 64], sizes = [1, 32], strides = [1, 1]} : vector<1x128xf32> to vector<1x32xf32>
    %87 = vector.extract_strided_slice %83 {offsets = [0, 96], sizes = [1, 32], strides = [1, 1]} : vector<1x128xf32> to vector<1x32xf32>
    %88 = arith.mulf %85, %45 : vector<1x32xf32>
    %89 = arith.mulf %84, %86 : vector<1x32xf32>
    %90 = arith.addf %88, %89 : vector<1x32xf32>
    %91 = math.tanh %90 : vector<1x32xf32>
    %92 = arith.mulf %87, %91 : vector<1x32xf32>
    %93 = tpu.concatenate %92, %66 in 1 : vector<1x32xf32>, vector<1x32xf32> -> vector<1x64xf32>
    %94 = arith.truncf %93 : vector<1x64xf32> to vector<1x64xbf16>
    %cst_40 = arith.constant dense<0.000000e+00> : vector<1x128xf32>
    %95 = tpu.matmul %94, %6, %cst_40 {dimension_numbers = #tpu.dot_dimension_numbers<[1], [0], [0], [1], [0, 0, 1, 1], [], []>} : vector<1x64xbf16>, vector<64x128xbf16>, vector<1x128xf32> -> vector<1x128xf32>
    %96 = arith.addf %95, %10 : vector<1x128xf32>
    %97 = math.tanh %96 : vector<1x128xf32>
    %cst_41 = arith.constant 5.000000e-01 : f32
    %98 = vector.broadcast %cst_41 : f32 to vector<1x128xf32>
    %99 = arith.mulf %98, %97 : vector<1x128xf32>
    %cst_42 = arith.constant 5.000000e-01 : f32
    %100 = vector.broadcast %cst_42 : f32 to vector<1x128xf32>
    %101 = arith.addf %99, %100 : vector<1x128xf32>
    %102 = arith.select %18, %97, %101 : vector<1x128xi1>, vector<1x128xf32>
    %103 = vector.extract_strided_slice %102 {offsets = [0, 0], sizes = [1, 32], strides = [1, 1]} : vector<1x128xf32> to vector<1x32xf32>
    %104 = vector.extract_strided_slice %102 {offsets = [0, 32], sizes = [1, 32], strides = [1, 1]} : vector<1x128xf32> to vector<1x32xf32>
    %105 = vector.extract_strided_slice %102 {offsets = [0, 64], sizes = [1, 32], strides = [1, 1]} : vector<1x128xf32> to vector<1x32xf32>
    %106 = vector.extract_strided_slice %102 {offsets = [0, 96], sizes = [1, 32], strides = [1, 1]} : vector<1x128xf32> to vector<1x32xf32>
    %107 = arith.mulf %104, %64 : vector<1x32xf32>
    %108 = arith.mulf %103, %105 : vector<1x32xf32>
    %109 = arith.addf %107, %108 : vector<1x32xf32>
    %110 = math.tanh %109 : vector<1x32xf32>
    %111 = arith.mulf %106, %110 : vector<1x32xf32>
    %112 = arith.truncf %111 : vector<1x32xf32> to vector<1x32xbf16>
    %cst_43 = arith.constant dense<0.000000e+00> : vector<1x128xf32>
    %113 = tpu.matmul %112, %11, %cst_43 {dimension_numbers = #tpu.dot_dimension_numbers<[1], [0], [0], [1], [0, 0, 1, 1], [], []>} : vector<1x32xbf16>, vector<32x128xbf16>, vector<1x128xf32> -> vector<1x128xf32>
    %114 = arith.addf %113, %12 : vector<1x128xf32>
    %115 = arith.index_cast %c1_i32 : i32 to index
    %c0_44 = arith.constant 0 : index
    %116 = vector.load %arg8[%115, %c0_44] : memref<8x128xf32, #tpu.memory_space<vmem>>, vector<1x128xf32>
    tpu.vector_store %arg8[%115, %c0_44], %114 {strides = array<i32>} : memref<8x128xf32, #tpu.memory_space<vmem>>, vector<1x128xf32>,
    %c2_i32 = arith.constant 2 : i32
    %117 = arith.index_cast %c2_i32 : i32 to index
    %c0_45 = arith.constant 0 : index
    %118 = vector.load %arg1[%117, %c0_45] : memref<8x32xf32, #tpu.memory_space<vmem>>, vector<1x32xf32>
    %119 = tpu.concatenate %118, %92 in 1 : vector<1x32xf32>, vector<1x32xf32> -> vector<1x64xf32>
    %120 = arith.truncf %119 : vector<1x64xf32> to vector<1x64xbf16>
    %cst_46 = arith.constant dense<0.000000e+00> : vector<1x128xf32>
    %121 = tpu.matmul %120, %4, %cst_46 {dimension_numbers = #tpu.dot_dimension_numbers<[1], [0], [0], [1], [0, 0, 1, 1], [], []>} : vector<1x64xbf16>, vector<64x128xbf16>, vector<1x128xf32> -> vector<1x128xf32>
    %122 = arith.addf %121, %8 : vector<1x128xf32>
    %123 = math.tanh %122 : vector<1x128xf32>
    %cst_47 = arith.constant 5.000000e-01 : f32
    %124 = vector.broadcast %cst_47 : f32 to vector<1x128xf32>
    %125 = arith.mulf %124, %123 : vector<1x128xf32>
    %cst_48 = arith.constant 5.000000e-01 : f32
    %126 = vector.broadcast %cst_48 : f32 to vector<1x128xf32>
    %127 = arith.addf %125, %126 : vector<1x128xf32>
    %128 = arith.select %18, %123, %127 : vector<1x128xi1>, vector<1x128xf32>
    %129 = vector.extract_strided_slice %128 {offsets = [0, 0], sizes = [1, 32], strides = [1, 1]} : vector<1x128xf32> to vector<1x32xf32>
    %130 = vector.extract_strided_slice %128 {offsets = [0, 32], sizes = [1, 32], strides = [1, 1]} : vector<1x128xf32> to vector<1x32xf32>
    %131 = vector.extract_strided_slice %128 {offsets = [0, 64], sizes = [1, 32], strides = [1, 1]} : vector<1x128xf32> to vector<1x32xf32>
    %132 = vector.extract_strided_slice %128 {offsets = [0, 96], sizes = [1, 32], strides = [1, 1]} : vector<1x128xf32> to vector<1x32xf32>
    %133 = arith.mulf %130, %90 : vector<1x32xf32>
    %134 = arith.mulf %129, %131 : vector<1x32xf32>
    %135 = arith.addf %133, %134 : vector<1x32xf32>
    %136 = math.tanh %135 : vector<1x32xf32>
    %137 = arith.mulf %132, %136 : vector<1x32xf32>
    %138 = tpu.concatenate %137, %111 in 1 : vector<1x32xf32>, vector<1x32xf32> -> vector<1x64xf32>
    %139 = arith.truncf %138 : vector<1x64xf32> to vector<1x64xbf16>
    %cst_49 = arith.constant dense<0.000000e+00> : vector<1x128xf32>
    %140 = tpu.matmul %139, %6, %cst_49 {dimension_numbers = #tpu.dot_dimension_numbers<[1], [0], [0], [1], [0, 0, 1, 1], [], []>} : vector<1x64xbf16>, vector<64x128xbf16>, vector<1x128xf32> -> vector<1x128xf32>
    %141 = arith.addf %140, %10 : vector<1x128xf32>
    %142 = math.tanh %141 : vector<1x128xf32>
    %cst_50 = arith.constant 5.000000e-01 : f32
    %143 = vector.broadcast %cst_50 : f32 to vector<1x128xf32>
    %144 = arith.mulf %143, %142 : vector<1x128xf32>
    %cst_51 = arith.constant 5.000000e-01 : f32
    %145 = vector.broadcast %cst_51 : f32 to vector<1x128xf32>
    %146 = arith.addf %144, %145 : vector<1x128xf32>
    %147 = arith.select %18, %142, %146 : vector<1x128xi1>, vector<1x128xf32>
    %148 = vector.extract_strided_slice %147 {offsets = [0, 0], sizes = [1, 32], strides = [1, 1]} : vector<1x128xf32> to vector<1x32xf32>
    %149 = vector.extract_strided_slice %147 {offsets = [0, 32], sizes = [1, 32], strides = [1, 1]} : vector<1x128xf32> to vector<1x32xf32>
    %150 = vector.extract_strided_slice %147 {offsets = [0, 64], sizes = [1, 32], strides = [1, 1]} : vector<1x128xf32> to vector<1x32xf32>
    %151 = vector.extract_strided_slice %147 {offsets = [0, 96], sizes = [1, 32], strides = [1, 1]} : vector<1x128xf32> to vector<1x32xf32>
    %152 = arith.mulf %149, %109 : vector<1x32xf32>
    %153 = arith.mulf %148, %150 : vector<1x32xf32>
    %154 = arith.addf %152, %153 : vector<1x32xf32>
    %155 = math.tanh %154 : vector<1x32xf32>
    %156 = arith.mulf %151, %155 : vector<1x32xf32>
    %157 = arith.truncf %156 : vector<1x32xf32> to vector<1x32xbf16>
    %cst_52 = arith.constant dense<0.000000e+00> : vector<1x128xf32>
    %158 = tpu.matmul %157, %11, %cst_52 {dimension_numbers = #tpu.dot_dimension_numbers<[1], [0], [0], [1], [0, 0, 1, 1], [], []>} : vector<1x32xbf16>, vector<32x128xbf16>, vector<1x128xf32> -> vector<1x128xf32>
    %159 = arith.addf %158, %12 : vector<1x128xf32>
    %160 = arith.index_cast %c2_i32 : i32 to index
    %c0_53 = arith.constant 0 : index
    %161 = vector.load %arg8[%160, %c0_53] : memref<8x128xf32, #tpu.memory_space<vmem>>, vector<1x128xf32>
    tpu.vector_store %arg8[%160, %c0_53], %159 {strides = array<i32>} : memref<8x128xf32, #tpu.memory_space<vmem>>, vector<1x128xf32>,
    %c3_i32 = arith.constant 3 : i32
    %162 = arith.index_cast %c3_i32 : i32 to index
    %c0_54 = arith.constant 0 : index
    %163 = vector.load %arg1[%162, %c0_54] : memref<8x32xf32, #tpu.memory_space<vmem>>, vector<1x32xf32>
    %164 = tpu.concatenate %163, %137 in 1 : vector<1x32xf32>, vector<1x32xf32> -> vector<1x64xf32>
    %165 = arith.truncf %164 : vector<1x64xf32> to vector<1x64xbf16>
    %cst_55 = arith.constant dense<0.000000e+00> : vector<1x128xf32>
    %166 = tpu.matmul %165, %4, %cst_55 {dimension_numbers = #tpu.dot_dimension_numbers<[1], [0], [0], [1], [0, 0, 1, 1], [], []>} : vector<1x64xbf16>, vector<64x128xbf16>, vector<1x128xf32> -> vector<1x128xf32>
    %167 = arith.addf %166, %8 : vector<1x128xf32>
    %168 = math.tanh %167 : vector<1x128xf32>
    %cst_56 = arith.constant 5.000000e-01 : f32
    %169 = vector.broadcast %cst_56 : f32 to vector<1x128xf32>
    %170 = arith.mulf %169, %168 : vector<1x128xf32>
    %cst_57 = arith.constant 5.000000e-01 : f32
    %171 = vector.broadcast %cst_57 : f32 to vector<1x128xf32>
    %172 = arith.addf %170, %171 : vector<1x128xf32>
    %173 = arith.select %18, %168, %172 : vector<1x128xi1>, vector<1x128xf32>
    %174 = vector.extract_strided_slice %173 {offsets = [0, 0], sizes = [1, 32], strides = [1, 1]} : vector<1x128xf32> to vector<1x32xf32>
    %175 = vector.extract_strided_slice %173 {offsets = [0, 32], sizes = [1, 32], strides = [1, 1]} : vector<1x128xf32> to vector<1x32xf32>
    %176 = vector.extract_strided_slice %173 {offsets = [0, 64], sizes = [1, 32], strides = [1, 1]} : vector<1x128xf32> to vector<1x32xf32>
    %177 = vector.extract_strided_slice %173 {offsets = [0, 96], sizes = [1, 32], strides = [1, 1]} : vector<1x128xf32> to vector<1x32xf32>
    %178 = arith.mulf %175, %135 : vector<1x32xf32>
    %179 = arith.mulf %174, %176 : vector<1x32xf32>
    %180 = arith.addf %178, %179 : vector<1x32xf32>
    %181 = math.tanh %180 : vector<1x32xf32>
    %182 = arith.mulf %177, %181 : vector<1x32xf32>
    %183 = tpu.concatenate %182, %156 in 1 : vector<1x32xf32>, vector<1x32xf32> -> vector<1x64xf32>
    %184 = arith.truncf %183 : vector<1x64xf32> to vector<1x64xbf16>
    %cst_58 = arith.constant dense<0.000000e+00> : vector<1x128xf32>
    %185 = tpu.matmul %184, %6, %cst_58 {dimension_numbers = #tpu.dot_dimension_numbers<[1], [0], [0], [1], [0, 0, 1, 1], [], []>} : vector<1x64xbf16>, vector<64x128xbf16>, vector<1x128xf32> -> vector<1x128xf32>
    %186 = arith.addf %185, %10 : vector<1x128xf32>
    %187 = math.tanh %186 : vector<1x128xf32>
    %cst_59 = arith.constant 5.000000e-01 : f32
    %188 = vector.broadcast %cst_59 : f32 to vector<1x128xf32>
    %189 = arith.mulf %188, %187 : vector<1x128xf32>
    %cst_60 = arith.constant 5.000000e-01 : f32
    %190 = vector.broadcast %cst_60 : f32 to vector<1x128xf32>
    %191 = arith.addf %189, %190 : vector<1x128xf32>
    %192 = arith.select %18, %187, %191 : vector<1x128xi1>, vector<1x128xf32>
    %193 = vector.extract_strided_slice %192 {offsets = [0, 0], sizes = [1, 32], strides = [1, 1]} : vector<1x128xf32> to vector<1x32xf32>
    %194 = vector.extract_strided_slice %192 {offsets = [0, 32], sizes = [1, 32], strides = [1, 1]} : vector<1x128xf32> to vector<1x32xf32>
    %195 = vector.extract_strided_slice %192 {offsets = [0, 64], sizes = [1, 32], strides = [1, 1]} : vector<1x128xf32> to vector<1x32xf32>
    %196 = vector.extract_strided_slice %192 {offsets = [0, 96], sizes = [1, 32], strides = [1, 1]} : vector<1x128xf32> to vector<1x32xf32>
    %197 = arith.mulf %194, %154 : vector<1x32xf32>
    %198 = arith.mulf %193, %195 : vector<1x32xf32>
    %199 = arith.addf %197, %198 : vector<1x32xf32>
    %200 = math.tanh %199 : vector<1x32xf32>
    %201 = arith.mulf %196, %200 : vector<1x32xf32>
    %202 = arith.truncf %201 : vector<1x32xf32> to vector<1x32xbf16>
    %cst_61 = arith.constant dense<0.000000e+00> : vector<1x128xf32>
    %203 = tpu.matmul %202, %11, %cst_61 {dimension_numbers = #tpu.dot_dimension_numbers<[1], [0], [0], [1], [0, 0, 1, 1], [], []>} : vector<1x32xbf16>, vector<32x128xbf16>, vector<1x128xf32> -> vector<1x128xf32>
    %204 = arith.addf %203, %12 : vector<1x128xf32>
    %205 = arith.index_cast %c3_i32 : i32 to index
    %c0_62 = arith.constant 0 : index
    %206 = vector.load %arg8[%205, %c0_62] : memref<8x128xf32, #tpu.memory_space<vmem>>, vector<1x128xf32>
    tpu.vector_store %arg8[%205, %c0_62], %204 {strides = array<i32>} : memref<8x128xf32, #tpu.memory_space<vmem>>, vector<1x128xf32>,
    %c4_i32 = arith.constant 4 : i32
    %207 = arith.index_cast %c4_i32 : i32 to index
    %c0_63 = arith.constant 0 : index
    %208 = vector.load %arg1[%207, %c0_63] : memref<8x32xf32, #tpu.memory_space<vmem>>, vector<1x32xf32>
    %209 = tpu.concatenate %208, %182 in 1 : vector<1x32xf32>, vector<1x32xf32> -> vector<1x64xf32>
    %210 = arith.truncf %209 : vector<1x64xf32> to vector<1x64xbf16>
    %cst_64 = arith.constant dense<0.000000e+00> : vector<1x128xf32>
    %211 = tpu.matmul %210, %4, %cst_64 {dimension_numbers = #tpu.dot_dimension_numbers<[1], [0], [0], [1], [0, 0, 1, 1], [], []>} : vector<1x64xbf16>, vector<64x128xbf16>, vector<1x128xf32> -> vector<1x128xf32>
    %212 = arith.addf %211, %8 : vector<1x128xf32>
    %213 = math.tanh %212 : vector<1x128xf32>
    %cst_65 = arith.constant 5.000000e-01 : f32
    %214 = vector.broadcast %cst_65 : f32 to vector<1x128xf32>
    %215 = arith.mulf %214, %213 : vector<1x128xf32>
    %cst_66 = arith.constant 5.000000e-01 : f32
    %216 = vector.broadcast %cst_66 : f32 to vector<1x128xf32>
    %217 = arith.addf %215, %216 : vector<1x128xf32>
    %218 = arith.select %18, %213, %217 : vector<1x128xi1>, vector<1x128xf32>
    %219 = vector.extract_strided_slice %218 {offsets = [0, 0], sizes = [1, 32], strides = [1, 1]} : vector<1x128xf32> to vector<1x32xf32>
    %220 = vector.extract_strided_slice %218 {offsets = [0, 32], sizes = [1, 32], strides = [1, 1]} : vector<1x128xf32> to vector<1x32xf32>
    %221 = vector.extract_strided_slice %218 {offsets = [0, 64], sizes = [1, 32], strides = [1, 1]} : vector<1x128xf32> to vector<1x32xf32>
    %222 = vector.extract_strided_slice %218 {offsets = [0, 96], sizes = [1, 32], strides = [1, 1]} : vector<1x128xf32> to vector<1x32xf32>
    %223 = arith.mulf %220, %180 : vector<1x32xf32>
    %224 = arith.mulf %219, %221 : vector<1x32xf32>
    %225 = arith.addf %223, %224 : vector<1x32xf32>
    %226 = math.tanh %225 : vector<1x32xf32>
    %227 = arith.mulf %222, %226 : vector<1x32xf32>
    %228 = tpu.concatenate %227, %201 in 1 : vector<1x32xf32>, vector<1x32xf32> -> vector<1x64xf32>
    %229 = arith.truncf %228 : vector<1x64xf32> to vector<1x64xbf16>
    %cst_67 = arith.constant dense<0.000000e+00> : vector<1x128xf32>
    %230 = tpu.matmul %229, %6, %cst_67 {dimension_numbers = #tpu.dot_dimension_numbers<[1], [0], [0], [1], [0, 0, 1, 1], [], []>} : vector<1x64xbf16>, vector<64x128xbf16>, vector<1x128xf32> -> vector<1x128xf32>
    %231 = arith.addf %230, %10 : vector<1x128xf32>
    %232 = math.tanh %231 : vector<1x128xf32>
    %cst_68 = arith.constant 5.000000e-01 : f32
    %233 = vector.broadcast %cst_68 : f32 to vector<1x128xf32>
    %234 = arith.mulf %233, %232 : vector<1x128xf32>
    %cst_69 = arith.constant 5.000000e-01 : f32
    %235 = vector.broadcast %cst_69 : f32 to vector<1x128xf32>
    %236 = arith.addf %234, %235 : vector<1x128xf32>
    %237 = arith.select %18, %232, %236 : vector<1x128xi1>, vector<1x128xf32>
    %238 = vector.extract_strided_slice %237 {offsets = [0, 0], sizes = [1, 32], strides = [1, 1]} : vector<1x128xf32> to vector<1x32xf32>
    %239 = vector.extract_strided_slice %237 {offsets = [0, 32], sizes = [1, 32], strides = [1, 1]} : vector<1x128xf32> to vector<1x32xf32>
    %240 = vector.extract_strided_slice %237 {offsets = [0, 64], sizes = [1, 32], strides = [1, 1]} : vector<1x128xf32> to vector<1x32xf32>
    %241 = vector.extract_strided_slice %237 {offsets = [0, 96], sizes = [1, 32], strides = [1, 1]} : vector<1x128xf32> to vector<1x32xf32>
    %242 = arith.mulf %239, %199 : vector<1x32xf32>
    %243 = arith.mulf %238, %240 : vector<1x32xf32>
    %244 = arith.addf %242, %243 : vector<1x32xf32>
    %245 = math.tanh %244 : vector<1x32xf32>
    %246 = arith.mulf %241, %245 : vector<1x32xf32>
    %247 = arith.truncf %246 : vector<1x32xf32> to vector<1x32xbf16>
    %cst_70 = arith.constant dense<0.000000e+00> : vector<1x128xf32>
    %248 = tpu.matmul %247, %11, %cst_70 {dimension_numbers = #tpu.dot_dimension_numbers<[1], [0], [0], [1], [0, 0, 1, 1], [], []>} : vector<1x32xbf16>, vector<32x128xbf16>, vector<1x128xf32> -> vector<1x128xf32>
    %249 = arith.addf %248, %12 : vector<1x128xf32>
    %250 = arith.index_cast %c4_i32 : i32 to index
    %c0_71 = arith.constant 0 : index
    %251 = vector.load %arg8[%250, %c0_71] : memref<8x128xf32, #tpu.memory_space<vmem>>, vector<1x128xf32>
    tpu.vector_store %arg8[%250, %c0_71], %249 {strides = array<i32>} : memref<8x128xf32, #tpu.memory_space<vmem>>, vector<1x128xf32>,
    %c5_i32 = arith.constant 5 : i32
    %252 = arith.index_cast %c5_i32 : i32 to index
    %c0_72 = arith.constant 0 : index
    %253 = vector.load %arg1[%252, %c0_72] : memref<8x32xf32, #tpu.memory_space<vmem>>, vector<1x32xf32>
    %254 = tpu.concatenate %253, %227 in 1 : vector<1x32xf32>, vector<1x32xf32> -> vector<1x64xf32>
    %255 = arith.truncf %254 : vector<1x64xf32> to vector<1x64xbf16>
    %cst_73 = arith.constant dense<0.000000e+00> : vector<1x128xf32>
    %256 = tpu.matmul %255, %4, %cst_73 {dimension_numbers = #tpu.dot_dimension_numbers<[1], [0], [0], [1], [0, 0, 1, 1], [], []>} : vector<1x64xbf16>, vector<64x128xbf16>, vector<1x128xf32> -> vector<1x128xf32>
    %257 = arith.addf %256, %8 : vector<1x128xf32>
    %258 = math.tanh %257 : vector<1x128xf32>
    %cst_74 = arith.constant 5.000000e-01 : f32
    %259 = vector.broadcast %cst_74 : f32 to vector<1x128xf32>
    %260 = arith.mulf %259, %258 : vector<1x128xf32>
    %cst_75 = arith.constant 5.000000e-01 : f32
    %261 = vector.broadcast %cst_75 : f32 to vector<1x128xf32>
    %262 = arith.addf %260, %261 : vector<1x128xf32>
    %263 = arith.select %18, %258, %262 : vector<1x128xi1>, vector<1x128xf32>
    %264 = vector.extract_strided_slice %263 {offsets = [0, 0], sizes = [1, 32], strides = [1, 1]} : vector<1x128xf32> to vector<1x32xf32>
    %265 = vector.extract_strided_slice %263 {offsets = [0, 32], sizes = [1, 32], strides = [1, 1]} : vector<1x128xf32> to vector<1x32xf32>
    %266 = vector.extract_strided_slice %263 {offsets = [0, 64], sizes = [1, 32], strides = [1, 1]} : vector<1x128xf32> to vector<1x32xf32>
    %267 = vector.extract_strided_slice %263 {offsets = [0, 96], sizes = [1, 32], strides = [1, 1]} : vector<1x128xf32> to vector<1x32xf32>
    %268 = arith.mulf %265, %225 : vector<1x32xf32>
    %269 = arith.mulf %264, %266 : vector<1x32xf32>
    %270 = arith.addf %268, %269 : vector<1x32xf32>
    %271 = math.tanh %270 : vector<1x32xf32>
    %272 = arith.mulf %267, %271 : vector<1x32xf32>
    %273 = tpu.concatenate %272, %246 in 1 : vector<1x32xf32>, vector<1x32xf32> -> vector<1x64xf32>
    %274 = arith.truncf %273 : vector<1x64xf32> to vector<1x64xbf16>
    %cst_76 = arith.constant dense<0.000000e+00> : vector<1x128xf32>
    %275 = tpu.matmul %274, %6, %cst_76 {dimension_numbers = #tpu.dot_dimension_numbers<[1], [0], [0], [1], [0, 0, 1, 1], [], []>} : vector<1x64xbf16>, vector<64x128xbf16>, vector<1x128xf32> -> vector<1x128xf32>
    %276 = arith.addf %275, %10 : vector<1x128xf32>
    %277 = math.tanh %276 : vector<1x128xf32>
    %cst_77 = arith.constant 5.000000e-01 : f32
    %278 = vector.broadcast %cst_77 : f32 to vector<1x128xf32>
    %279 = arith.mulf %278, %277 : vector<1x128xf32>
    %cst_78 = arith.constant 5.000000e-01 : f32
    %280 = vector.broadcast %cst_78 : f32 to vector<1x128xf32>
    %281 = arith.addf %279, %280 : vector<1x128xf32>
    %282 = arith.select %18, %277, %281 : vector<1x128xi1>, vector<1x128xf32>
    %283 = vector.extract_strided_slice %282 {offsets = [0, 0], sizes = [1, 32], strides = [1, 1]} : vector<1x128xf32> to vector<1x32xf32>
    %284 = vector.extract_strided_slice %282 {offsets = [0, 32], sizes = [1, 32], strides = [1, 1]} : vector<1x128xf32> to vector<1x32xf32>
    %285 = vector.extract_strided_slice %282 {offsets = [0, 64], sizes = [1, 32], strides = [1, 1]} : vector<1x128xf32> to vector<1x32xf32>
    %286 = vector.extract_strided_slice %282 {offsets = [0, 96], sizes = [1, 32], strides = [1, 1]} : vector<1x128xf32> to vector<1x32xf32>
    %287 = arith.mulf %284, %244 : vector<1x32xf32>
    %288 = arith.mulf %283, %285 : vector<1x32xf32>
    %289 = arith.addf %287, %288 : vector<1x32xf32>
    %290 = math.tanh %289 : vector<1x32xf32>
    %291 = arith.mulf %286, %290 : vector<1x32xf32>
    %292 = arith.truncf %291 : vector<1x32xf32> to vector<1x32xbf16>
    %cst_79 = arith.constant dense<0.000000e+00> : vector<1x128xf32>
    %293 = tpu.matmul %292, %11, %cst_79 {dimension_numbers = #tpu.dot_dimension_numbers<[1], [0], [0], [1], [0, 0, 1, 1], [], []>} : vector<1x32xbf16>, vector<32x128xbf16>, vector<1x128xf32> -> vector<1x128xf32>
    %294 = arith.addf %293, %12 : vector<1x128xf32>
    %295 = arith.index_cast %c5_i32 : i32 to index
    %c0_80 = arith.constant 0 : index
    %296 = vector.load %arg8[%295, %c0_80] : memref<8x128xf32, #tpu.memory_space<vmem>>, vector<1x128xf32>
    tpu.vector_store %arg8[%295, %c0_80], %294 {strides = array<i32>} : memref<8x128xf32, #tpu.memory_space<vmem>>, vector<1x128xf32>,
    %c6_i32 = arith.constant 6 : i32
    %297 = arith.index_cast %c6_i32 : i32 to index
    %c0_81 = arith.constant 0 : index
    %298 = vector.load %arg1[%297, %c0_81] : memref<8x32xf32, #tpu.memory_space<vmem>>, vector<1x32xf32>
    %299 = tpu.concatenate %298, %272 in 1 : vector<1x32xf32>, vector<1x32xf32> -> vector<1x64xf32>
    %300 = arith.truncf %299 : vector<1x64xf32> to vector<1x64xbf16>
    %cst_82 = arith.constant dense<0.000000e+00> : vector<1x128xf32>
    %301 = tpu.matmul %300, %4, %cst_82 {dimension_numbers = #tpu.dot_dimension_numbers<[1], [0], [0], [1], [0, 0, 1, 1], [], []>} : vector<1x64xbf16>, vector<64x128xbf16>, vector<1x128xf32> -> vector<1x128xf32>
    %302 = arith.addf %301, %8 : vector<1x128xf32>
    %303 = math.tanh %302 : vector<1x128xf32>
    %cst_83 = arith.constant 5.000000e-01 : f32
    %304 = vector.broadcast %cst_83 : f32 to vector<1x128xf32>
    %305 = arith.mulf %304, %303 : vector<1x128xf32>
    %cst_84 = arith.constant 5.000000e-01 : f32
    %306 = vector.broadcast %cst_84 : f32 to vector<1x128xf32>
    %307 = arith.addf %305, %306 : vector<1x128xf32>
    %308 = arith.select %18, %303, %307 : vector<1x128xi1>, vector<1x128xf32>
    %309 = vector.extract_strided_slice %308 {offsets = [0, 0], sizes = [1, 32], strides = [1, 1]} : vector<1x128xf32> to vector<1x32xf32>
    %310 = vector.extract_strided_slice %308 {offsets = [0, 32], sizes = [1, 32], strides = [1, 1]} : vector<1x128xf32> to vector<1x32xf32>
    %311 = vector.extract_strided_slice %308 {offsets = [0, 64], sizes = [1, 32], strides = [1, 1]} : vector<1x128xf32> to vector<1x32xf32>
    %312 = vector.extract_strided_slice %308 {offsets = [0, 96], sizes = [1, 32], strides = [1, 1]} : vector<1x128xf32> to vector<1x32xf32>
    %313 = arith.mulf %310, %270 : vector<1x32xf32>
    %314 = arith.mulf %309, %311 : vector<1x32xf32>
    %315 = arith.addf %313, %314 : vector<1x32xf32>
    %316 = math.tanh %315 : vector<1x32xf32>
    %317 = arith.mulf %312, %316 : vector<1x32xf32>
    %318 = tpu.concatenate %317, %291 in 1 : vector<1x32xf32>, vector<1x32xf32> -> vector<1x64xf32>
    %319 = arith.truncf %318 : vector<1x64xf32> to vector<1x64xbf16>
    %cst_85 = arith.constant dense<0.000000e+00> : vector<1x128xf32>
    %320 = tpu.matmul %319, %6, %cst_85 {dimension_numbers = #tpu.dot_dimension_numbers<[1], [0], [0], [1], [0, 0, 1, 1], [], []>} : vector<1x64xbf16>, vector<64x128xbf16>, vector<1x128xf32> -> vector<1x128xf32>
    %321 = arith.addf %320, %10 : vector<1x128xf32>
    %322 = math.tanh %321 : vector<1x128xf32>
    %cst_86 = arith.constant 5.000000e-01 : f32
    %323 = vector.broadcast %cst_86 : f32 to vector<1x128xf32>
    %324 = arith.mulf %323, %322 : vector<1x128xf32>
    %cst_87 = arith.constant 5.000000e-01 : f32
    %325 = vector.broadcast %cst_87 : f32 to vector<1x128xf32>
    %326 = arith.addf %324, %325 : vector<1x128xf32>
    %327 = arith.select %18, %322, %326 : vector<1x128xi1>, vector<1x128xf32>
    %328 = vector.extract_strided_slice %327 {offsets = [0, 0], sizes = [1, 32], strides = [1, 1]} : vector<1x128xf32> to vector<1x32xf32>
    %329 = vector.extract_strided_slice %327 {offsets = [0, 32], sizes = [1, 32], strides = [1, 1]} : vector<1x128xf32> to vector<1x32xf32>
    %330 = vector.extract_strided_slice %327 {offsets = [0, 64], sizes = [1, 32], strides = [1, 1]} : vector<1x128xf32> to vector<1x32xf32>
    %331 = vector.extract_strided_slice %327 {offsets = [0, 96], sizes = [1, 32], strides = [1, 1]} : vector<1x128xf32> to vector<1x32xf32>
    %332 = arith.mulf %329, %289 : vector<1x32xf32>
    %333 = arith.mulf %328, %330 : vector<1x32xf32>
    %334 = arith.addf %332, %333 : vector<1x32xf32>
    %335 = math.tanh %334 : vector<1x32xf32>
    %336 = arith.mulf %331, %335 : vector<1x32xf32>
    %337 = arith.truncf %336 : vector<1x32xf32> to vector<1x32xbf16>
    %cst_88 = arith.constant dense<0.000000e+00> : vector<1x128xf32>
    %338 = tpu.matmul %337, %11, %cst_88 {dimension_numbers = #tpu.dot_dimension_numbers<[1], [0], [0], [1], [0, 0, 1, 1], [], []>} : vector<1x32xbf16>, vector<32x128xbf16>, vector<1x128xf32> -> vector<1x128xf32>
    %339 = arith.addf %338, %12 : vector<1x128xf32>
    %340 = arith.index_cast %c6_i32 : i32 to index
    %c0_89 = arith.constant 0 : index
    %341 = vector.load %arg8[%340, %c0_89] : memref<8x128xf32, #tpu.memory_space<vmem>>, vector<1x128xf32>
    tpu.vector_store %arg8[%340, %c0_89], %339 {strides = array<i32>} : memref<8x128xf32, #tpu.memory_space<vmem>>, vector<1x128xf32>,
    %c7_i32 = arith.constant 7 : i32
    %342 = arith.index_cast %c7_i32 : i32 to index
    %c0_90 = arith.constant 0 : index
    %343 = vector.load %arg1[%342, %c0_90] : memref<8x32xf32, #tpu.memory_space<vmem>>, vector<1x32xf32>
    %344 = tpu.concatenate %343, %317 in 1 : vector<1x32xf32>, vector<1x32xf32> -> vector<1x64xf32>
    %345 = arith.truncf %344 : vector<1x64xf32> to vector<1x64xbf16>
    %cst_91 = arith.constant dense<0.000000e+00> : vector<1x128xf32>
    %346 = tpu.matmul %345, %4, %cst_91 {dimension_numbers = #tpu.dot_dimension_numbers<[1], [0], [0], [1], [0, 0, 1, 1], [], []>} : vector<1x64xbf16>, vector<64x128xbf16>, vector<1x128xf32> -> vector<1x128xf32>
    %347 = arith.addf %346, %8 : vector<1x128xf32>
    %348 = math.tanh %347 : vector<1x128xf32>
    %cst_92 = arith.constant 5.000000e-01 : f32
    %349 = vector.broadcast %cst_92 : f32 to vector<1x128xf32>
    %350 = arith.mulf %349, %348 : vector<1x128xf32>
    %cst_93 = arith.constant 5.000000e-01 : f32
    %351 = vector.broadcast %cst_93 : f32 to vector<1x128xf32>
    %352 = arith.addf %350, %351 : vector<1x128xf32>
    %353 = arith.select %18, %348, %352 : vector<1x128xi1>, vector<1x128xf32>
    %354 = vector.extract_strided_slice %353 {offsets = [0, 0], sizes = [1, 32], strides = [1, 1]} : vector<1x128xf32> to vector<1x32xf32>
    %355 = vector.extract_strided_slice %353 {offsets = [0, 32], sizes = [1, 32], strides = [1, 1]} : vector<1x128xf32> to vector<1x32xf32>
    %356 = vector.extract_strided_slice %353 {offsets = [0, 64], sizes = [1, 32], strides = [1, 1]} : vector<1x128xf32> to vector<1x32xf32>
    %357 = vector.extract_strided_slice %353 {offsets = [0, 96], sizes = [1, 32], strides = [1, 1]} : vector<1x128xf32> to vector<1x32xf32>
    %358 = arith.mulf %355, %315 : vector<1x32xf32>
    %359 = arith.mulf %354, %356 : vector<1x32xf32>
    %360 = arith.addf %358, %359 : vector<1x32xf32>
    %361 = math.tanh %360 : vector<1x32xf32>
    %362 = arith.mulf %357, %361 : vector<1x32xf32>
    %363 = tpu.concatenate %362, %336 in 1 : vector<1x32xf32>, vector<1x32xf32> -> vector<1x64xf32>
    %364 = arith.truncf %363 : vector<1x64xf32> to vector<1x64xbf16>
    %cst_94 = arith.constant dense<0.000000e+00> : vector<1x128xf32>
    %365 = tpu.matmul %364, %6, %cst_94 {dimension_numbers = #tpu.dot_dimension_numbers<[1], [0], [0], [1], [0, 0, 1, 1], [], []>} : vector<1x64xbf16>, vector<64x128xbf16>, vector<1x128xf32> -> vector<1x128xf32>
    %366 = arith.addf %365, %10 : vector<1x128xf32>
    %367 = math.tanh %366 : vector<1x128xf32>
    %cst_95 = arith.constant 5.000000e-01 : f32
    %368 = vector.broadcast %cst_95 : f32 to vector<1x128xf32>
    %369 = arith.mulf %368, %367 : vector<1x128xf32>
    %cst_96 = arith.constant 5.000000e-01 : f32
    %370 = vector.broadcast %cst_96 : f32 to vector<1x128xf32>
    %371 = arith.addf %369, %370 : vector<1x128xf32>
    %372 = arith.select %18, %367, %371 : vector<1x128xi1>, vector<1x128xf32>
    %373 = vector.extract_strided_slice %372 {offsets = [0, 0], sizes = [1, 32], strides = [1, 1]} : vector<1x128xf32> to vector<1x32xf32>
    %374 = vector.extract_strided_slice %372 {offsets = [0, 32], sizes = [1, 32], strides = [1, 1]} : vector<1x128xf32> to vector<1x32xf32>
    %375 = vector.extract_strided_slice %372 {offsets = [0, 64], sizes = [1, 32], strides = [1, 1]} : vector<1x128xf32> to vector<1x32xf32>
    %376 = vector.extract_strided_slice %372 {offsets = [0, 96], sizes = [1, 32], strides = [1, 1]} : vector<1x128xf32> to vector<1x32xf32>
    %377 = arith.mulf %374, %334 : vector<1x32xf32>
    %378 = arith.mulf %373, %375 : vector<1x32xf32>
    %379 = arith.addf %377, %378 : vector<1x32xf32>
    %380 = math.tanh %379 : vector<1x32xf32>
    %381 = arith.mulf %376, %380 : vector<1x32xf32>
    %382 = arith.truncf %381 : vector<1x32xf32> to vector<1x32xbf16>
    %cst_97 = arith.constant dense<0.000000e+00> : vector<1x128xf32>
    %383 = tpu.matmul %382, %11, %cst_97 {dimension_numbers = #tpu.dot_dimension_numbers<[1], [0], [0], [1], [0, 0, 1, 1], [], []>} : vector<1x32xbf16>, vector<32x128xbf16>, vector<1x128xf32> -> vector<1x128xf32>
    %384 = arith.addf %383, %12 : vector<1x128xf32>
    %385 = arith.index_cast %c7_i32 : i32 to index
    %c0_98 = arith.constant 0 : index
    %386 = vector.load %arg8[%385, %c0_98] : memref<8x128xf32, #tpu.memory_space<vmem>>, vector<1x128xf32>
    tpu.vector_store %arg8[%385, %c0_98], %384 {strides = array<i32>} : memref<8x128xf32, #tpu.memory_space<vmem>>, vector<1x128xf32>,
    %c8_i32 = arith.constant 8 : i32
    %c0_99 = arith.constant 0 : index
    %c0_100 = arith.constant 0 : index
    %c0_101 = arith.constant 0 : index
    %387 = vector.load %arg9[%c0_99, %c0_100, %c0_101] : memref<2x1x32xf32, #tpu.memory_space<vmem>>, vector<1x1x32xf32>
    %388 = vector.shape_cast %387 : vector<1x1x32xf32> to vector<1x32xf32>
    %389 = vector.shape_cast %362 : vector<1x32xf32> to vector<1x1x32xf32>
    tpu.vector_store %arg9[%c0_99, %c0_100, %c0_101], %389 {strides = array<i32>} : memref<2x1x32xf32, #tpu.memory_space<vmem>>, vector<1x1x32xf32>,
    %c0_102 = arith.constant 0 : index
    %c0_103 = arith.constant 0 : index
    %c0_104 = arith.constant 0 : index
    %390 = vector.load %arg10[%c0_102, %c0_103, %c0_104] : memref<2x1x32xf32, #tpu.memory_space<vmem>>, vector<1x1x32xf32>
    %391 = vector.shape_cast %390 : vector<1x1x32xf32> to vector<1x32xf32>
    %392 = vector.shape_cast %360 : vector<1x32xf32> to vector<1x1x32xf32>
    tpu.vector_store %arg10[%c0_102, %c0_103, %c0_104], %392 {strides = array<i32>} : memref<2x1x32xf32, #tpu.memory_space<vmem>>, vector<1x1x32xf32>,
    %c1_105 = arith.constant 1 : index
    %c0_106 = arith.constant 0 : index
    %c0_107 = arith.constant 0 : index
    %393 = vector.load %arg9[%c1_105, %c0_106, %c0_107] : memref<2x1x32xf32, #tpu.memory_space<vmem>>, vector<1x1x32xf32>
    %394 = vector.shape_cast %393 : vector<1x1x32xf32> to vector<1x32xf32>
    %395 = vector.shape_cast %381 : vector<1x32xf32> to vector<1x1x32xf32>
    tpu.vector_store %arg9[%c1_105, %c0_106, %c0_107], %395 {strides = array<i32>} : memref<2x1x32xf32, #tpu.memory_space<vmem>>, vector<1x1x32xf32>,
    %c1_108 = arith.constant 1 : index
    %c0_109 = arith.constant 0 : index
    %c0_110 = arith.constant 0 : index
    %396 = vector.load %arg10[%c1_108, %c0_109, %c0_110] : memref<2x1x32xf32, #tpu.memory_space<vmem>>, vector<1x1x32xf32>
    %397 = vector.shape_cast %396 : vector<1x1x32xf32> to vector<1x32xf32>
    %398 = vector.shape_cast %379 : vector<1x32xf32> to vector<1x1x32xf32>
    tpu.vector_store %arg10[%c1_108, %c0_109, %c0_110], %398 {strides = array<i32>} : memref<2x1x32xf32, #tpu.memory_space<vmem>>, vector<1x1x32xf32>,
    return
  }
  func.func @transform_0(%arg0: i32) -> (i32, i32) {
    %c0_i32 = arith.constant 0 : i32
    %c0_i32_0 = arith.constant 0 : i32
    return %arg0, %c0_i32 : i32, i32
  }
  func.func @transform_1(%arg0: i32) -> (i32, i32, i32) {
    %c0_i32 = arith.constant 0 : i32
    %c0_i32_0 = arith.constant 0 : i32
    %c0_i32_1 = arith.constant 0 : i32
    %c0_i32_2 = arith.constant 0 : i32
    return %c0_i32, %c0_i32_0, %c0_i32_1 : i32, i32, i32
  }
  func.func @transform_2(%arg0: i32) -> (i32, i32, i32) {
    %c0_i32 = arith.constant 0 : i32
    %c0_i32_0 = arith.constant 0 : i32
    %c0_i32_1 = arith.constant 0 : i32
    %c0_i32_2 = arith.constant 0 : i32
    return %c0_i32, %c0_i32_0, %c0_i32_1 : i32, i32, i32
  }
  func.func @transform_3(%arg0: i32) -> (i32, i32) {
    %c0_i32 = arith.constant 0 : i32
    %c0_i32_0 = arith.constant 0 : i32
    %c0_i32_1 = arith.constant 0 : i32
    return %c0_i32, %c0_i32_0 : i32, i32
  }
  func.func @transform_4(%arg0: i32) -> (i32, i32) {
    %c0_i32 = arith.constant 0 : i32
    %c0_i32_0 = arith.constant 0 : i32
    %c0_i32_1 = arith.constant 0 : i32
    return %c0_i32, %c0_i32_0 : i32, i32
  }
  func.func @transform_5(%arg0: i32) -> (i32, i32, i32) {
    %c0_i32 = arith.constant 0 : i32
    %c0_i32_0 = arith.constant 0 : i32
    %c0_i32_1 = arith.constant 0 : i32
    %c0_i32_2 = arith.constant 0 : i32
    return %c0_i32, %c0_i32_0, %c0_i32_1 : i32, i32, i32
  }
  func.func @transform_6(%arg0: i32) -> (i32, i32, i32) {
    %c0_i32 = arith.constant 0 : i32
    %c0_i32_0 = arith.constant 0 : i32
    %c0_i32_1 = arith.constant 0 : i32
    %c0_i32_2 = arith.constant 0 : i32
    return %c0_i32, %c0_i32_0, %c0_i32_1 : i32, i32, i32
  }
  func.func @transform_7(%arg0: i32) -> (i32, i32) {
    %c0_i32 = arith.constant 0 : i32
    %c0_i32_0 = arith.constant 0 : i32
    return %arg0, %c0_i32 : i32, i32
  }
  func.func @transform_8(%arg0: i32) -> (i32, i32, i32) {
    %c0_i32 = arith.constant 0 : i32
    %c0_i32_0 = arith.constant 0 : i32
    %c0_i32_1 = arith.constant 0 : i32
    %c0_i32_2 = arith.constant 0 : i32
    return %c0_i32, %c0_i32_0, %c0_i32_1 : i32, i32, i32
  }
  func.func @transform_9(%arg0: i32) -> (i32, i32, i32) {
    %c0_i32 = arith.constant 0 : i32
    %c0_i32_0 = arith.constant 0 : i32
    %c0_i32_1 = arith.constant 0 : i32
    %c0_i32_2 = arith.constant 0 : i32
    return %c0_i32, %c0_i32_0, %c0_i32_1 : i32, i32, i32
  }
}

</mosaic_0001>

<llo_original>
// kernel: tpu_custom_call.1
$region0: #{tpu_custom_call.1}
  #allocation0 [shape = 'u32[]', space=smem, size = 0x4, offset = 0x4, fixed_abs, tag = 'smem constant byte address 0x4 - core index']
  #allocation1 [shape = 'u32[144,128]{1,0:T(1,128)}', space=vmem, size = 0x12000, scoped, tag = 'internal scratch']
  %s0 = inlined_call_operand.hbm [shape: f32[8,32], index: 0, kind: input, shape index: {}]
  %s1 = inlined_call_operand.hbm [shape: bf16[2,64,128], index: 1, kind: input, shape index: {}]
  %s2 = inlined_call_operand.vmem [shape: f32[2,1,128], index: 2, kind: input, shape index: {}]
  %s3 = inlined_call_operand.hbm [shape: bf16[32,128], index: 3, kind: input, shape index: {}]
  %s4 = inlined_call_operand.vmem [shape: f32[1,128], index: 4, kind: input, shape index: {}]
  %s5 = inlined_call_operand.vmem [shape: f32[2,1,32], index: 5, kind: input, shape index: {}]
  %s6 = inlined_call_operand.vmem [shape: f32[2,1,32], index: 6, kind: input, shape index: {}]
  %s7 = inlined_call_operand.hbm [shape: f32[8,128], index: 7, kind: output, shape index: {0}]
  %s8 = inlined_call_operand.hbm [shape: f32[2,1,32], index: 8, kind: output, shape index: {1}]
  %s9 = inlined_call_operand.hbm [shape: f32[2,1,32], index: 9, kind: output, shape index: {2}]
  %10 = xla_tuple %s7, %s8, %s9
  %s11 = sld [smem:[#allocation0]]
  $region70: #{tpu_custom_call.1} parent=0
    _
  %s13 = ssub.s32 1, %s11
  %s14 = scalar_select 0, %s13, %s11
  $region1: #{tpu_custom_call.1} parent=0
    #allocation2 [shape = 'u8[4096]{0}', space=vmem, size = 0x1000, scoped, tag = 'input window, operand 0, single buffered']
    #allocation3 [shape = 's32[1]{0}', space=sflag, size = 0x4, scoped, tag = 'scoped memory for tpu_custom_call.1']
    #allocation4 [shape = 's32[1]{0}', space=sflag, size = 0x4, scoped, tag = 'scoped memory for tpu_custom_call.1']
    #allocation5 [shape = 'u8[32768]{0}', space=vmem, size = 0x8000, scoped, tag = 'input window, operand 1, single buffered']
    #allocation6 [shape = 's32[1]{0}', space=sflag, size = 0x4, scoped, tag = 'scoped memory for tpu_custom_call.1']
    #allocation7 [shape = 'u8[8192]{0}', space=vmem, size = 0x2000, scoped, tag = 'input window, operand 3, single buffered']
    #allocation8 [shape = 'u8[4096]{0}', space=vmem, size = 0x1000, scoped, tag = 'output window, operand 0, single buffered']
    #allocation9 [shape = 'u8[1024]{0}', space=vmem, size = 0x400, scoped, tag = 'output window, operand 1, single buffered']
    #allocation10 [shape = 's32[1]{0}', space=sflag, size = 0x4, scoped, tag = 'scoped memory for tpu_custom_call.1']
    #allocation11 [shape = 'u8[1024]{0}', space=vmem, size = 0x400, scoped, tag = 'output window, operand 2, single buffered']
    %15 = vsyncpa [#allocation3], 0
    %16 = vsyncpa [#allocation6], 0
    %17 = vsyncpa [#allocation4], 0
    %18 = vsyncpa [#allocation10], 0
    // Predicated region
    $region2: #{tpu_custom_call.1} parent=1 // pred_check
      _
    $region3: #{tpu_custom_call.1} parent=1 // pred_check_branch
      %20 = sbr.rel (0) target = $region5
    $region4: #{tpu_custom_call.1} parent=1 // pred_region
      %s22 = ssub.s32 128, 128
      %23 = vsyncadd [#allocation3], %s22
      %s25 = sshll.u32 [#allocation2], 4
      %s26 = int_to_ptr.vmem [resolvable:$true] %s25
      %28 = dma.hbm_to_vmem [thread:$0]  %s0, 128, %s26, [#allocation3]
    $region5: #{tpu_custom_call.1} parent=1 // pred_fallthru
      _
    // Predicated region
    $region6: #{tpu_custom_call.1} parent=1 // pred_check
      _
    $region7: #{tpu_custom_call.1} parent=1 // pred_check_branch
      %30 = sbr.rel (0) target = $region9
    $region8: #{tpu_custom_call.1} parent=1 // pred_region
      %s32 = ssub.s32 1024, 1024
      %33 = vsyncadd [#allocation6], %s32
      %s34 = sshll.u32 [#allocation5], 4
      %s35 = int_to_ptr.vmem [resolvable:$true] %s34
      %40 = dma.hbm_to_vmem [thread:$0]  %s1, 1024, %s35, [#allocation6], 64, 64, 4
    $region9: #{tpu_custom_call.1} parent=1 // pred_fallthru
      _
    // Predicated region
    $region10: #{tpu_custom_call.1} parent=1 // pred_check
      _
    $region11: #{tpu_custom_call.1} parent=1 // pred_check_branch
      %42 = sbr.rel (0) target = $region13
    $region12: #{tpu_custom_call.1} parent=1 // pred_region
      _
    $region13: #{tpu_custom_call.1} parent=1 // pred_fallthru
      _
    // Predicated region
    $region14: #{tpu_custom_call.1} parent=1 // pred_check
      _
    $region15: #{tpu_custom_call.1} parent=1 // pred_check_branch
      %44 = sbr.rel (0) target = $region17
    $region16: #{tpu_custom_call.1} parent=1 // pred_region
      %s46 = ssub.s32 256, 256
      %47 = vsyncadd [#allocation6], %s46
      %s48 = sshll.u32 [#allocation7], 4
      %s49 = int_to_ptr.vmem [resolvable:$true] %s48
      %54 = dma.hbm_to_vmem [thread:$0]  %s3, 256, %s49, [#allocation6], 64, 64, 4
    $region17: #{tpu_custom_call.1} parent=1 // pred_fallthru
      _
    // Predicated region
    $region18: #{tpu_custom_call.1} parent=1 // pred_check
      _
    $region19: #{tpu_custom_call.1} parent=1 // pred_check_branch
      %56 = sbr.rel (0) target = $region21
    $region20: #{tpu_custom_call.1} parent=1 // pred_region
      _
    $region21: #{tpu_custom_call.1} parent=1 // pred_fallthru
      _
    // Predicated region
    $region22: #{tpu_custom_call.1} parent=1 // pred_check
      _
    $region23: #{tpu_custom_call.1} parent=1 // pred_check_branch
      %58 = sbr.rel (0) target = $region25
    $region24: #{tpu_custom_call.1} parent=1 // pred_region
      _
    $region25: #{tpu_custom_call.1} parent=1 // pred_fallthru
      _
    // Predicated region
    $region26: #{tpu_custom_call.1} parent=1 // pred_check
      _
    $region27: #{tpu_custom_call.1} parent=1 // pred_check_branch
      %60 = sbr.rel (0) target = $region29
    $region28: #{tpu_custom_call.1} parent=1 // pred_region
      _
    $region29: #{tpu_custom_call.1} parent=1 // pred_fallthru
      _
    // Predicated region
    $region30: #{tpu_custom_call.1} parent=1 // pred_check
      _
    $region31: #{tpu_custom_call.1} parent=1 // pred_check_branch
      %62 = sbr.rel (0) target = $region33
    $region32: #{tpu_custom_call.1} parent=1 // pred_region
      %63 = dma.done [#allocation3], 128
    $region33: #{tpu_custom_call.1} parent=1 // pred_fallthru
      _
    // Predicated region
    $region34: #{tpu_custom_call.1} parent=1 // pred_check
      _
    $region35: #{tpu_custom_call.1} parent=1 // pred_check_branch
      %65 = sbr.rel (0) target = $region37
    $region36: #{tpu_custom_call.1} parent=1 // pred_region
      %66 = dma.done [#allocation6], 1024
    $region37: #{tpu_custom_call.1} parent=1 // pred_fallthru
      _
    // Predicated region
    $region38: #{tpu_custom_call.1} parent=1 // pred_check
      _
    $region39: #{tpu_custom_call.1} parent=1 // pred_check_branch
      %68 = sbr.rel (0) target = $region41
    $region40: #{tpu_custom_call.1} parent=1 // pred_region
      %69 = dma.done [#allocation6], 256
    $region41: #{tpu_custom_call.1} parent=1 // pred_fallthru
      _
    %p71 = scmp.eq.s32.totalorder 0, 0
    // Predicated region
    $region42: #{tpu_custom_call.1} parent=1 // pred_check
      %p72 = pneg %p71
    $region43: #{tpu_custom_call.1} parent=1 // pred_check_branch
      %74 = sbr.rel (%p72) target = $region45
    $region44: #{tpu_custom_call.1} parent=1 // pred_region
      %v75 = vld [vmem:[%s5] sm:$0x1]
      %v76 = vld [vmem:[%s5 + $0x1] sm:$0x1]
      %vm77 = vcmask 253952
      %78 = vst.msk [vmem:[#allocation9] sm:$0x1] %vm77, %v75
      %79 = vst.msk [vmem:[#allocation9 + $0x1] sm:$0x1] %vm77, %v76
      %v80 = vld [vmem:[%s6] sm:$0x1]
      %v81 = vld [vmem:[%s6 + $0x1] sm:$0x1]
      %82 = vst.msk [vmem:[#allocation11] sm:$0x1] %vm77, %v80
      %83 = vst.msk [vmem:[#allocation11 + $0x1] sm:$0x1] %vm77, %v81
    $region45: #{tpu_custom_call.1} parent=1 // pred_fallthru
      _
    %v84 = vld [vmem:[#allocation5] sm:$0xf]
    %v85 = vld [vmem:[#allocation5 + $0x4] sm:$0xf]
    %v86 = vld [vmem:[#allocation5 + $0x8] sm:$0xf]
    %v87 = vld [vmem:[#allocation5 + $0xc] sm:$0xf]
    %v88 = vld [vmem:[#allocation5 + $0x10] sm:$0xf]
    %v89 = vld [vmem:[#allocation5 + $0x14] sm:$0xf]
    %v90 = vld [vmem:[#allocation5 + $0x18] sm:$0xf]
    %v91 = vld [vmem:[#allocation5 + $0x1c] sm:$0xf]
    %s92 = scalar_lea.vmem [#allocation5], 32
    %v93 = vld [vmem:[%s92] sm:$0xf]
    %v94 = vld [vmem:[%s92 + $0x4] sm:$0xf]
    %v95 = vld [vmem:[%s92 + $0x8] sm:$0xf]
    %v96 = vld [vmem:[%s92 + $0xc] sm:$0xf]
    %v97 = vld [vmem:[%s92 + $0x10] sm:$0xf]
    %v98 = vld [vmem:[%s92 + $0x14] sm:$0xf]
    %v99 = vld [vmem:[%s92 + $0x18] sm:$0xf]
    %v100 = vld [vmem:[%s92 + $0x1c] sm:$0xf]
    %v101 = vld [vmem:[%s2] sm:$0x1]
    %s102 = scalar_lea.vmem %s2, 1
    %v103 = vld [vmem:[%s102] sm:$0x1]
    %v104 = vld [vmem:[#allocation7] sm:$0xf]
    %v105 = vld [vmem:[#allocation7 + $0x4] sm:$0xf]
    %v106 = vld [vmem:[#allocation7 + $0x8] sm:$0xf]
    %v107 = vld [vmem:[#allocation7 + $0xc] sm:$0xf]
    %v108 = vld [vmem:[%s4] sm:$0x1]
    %v109 = vlaneseq
    %v110 = vand.u32 %v109, 127
    %vm111 = vcmp.ge.s32.totalorder %v110, 64
    %vm112 = vcmp.lt.s32.totalorder %v110, 96
    %vm113 = vmand %vm111, %vm112
    %v114 = vld [vmem:[#allocation9] sm:$0x1]
    %s115 = scalar_lea.vmem [#allocation9], 1
    %v116 = vld [vmem:[%s115] sm:$0x1]
    %v117 = vld [vmem:[#allocation11] sm:$0x1]
    %s118 = scalar_lea.vmem [#allocation11], 1
    %v119 = vld [vmem:[%s118] sm:$0x1]
    %v120 = vld [vmem:[#allocation2] sm:$0x1]
    %v122 = vlaneseq
    %v123 = vshrl.u32 %v122, 7
    %v124 = vsub.s32 0, %v123
    %v125 = vrot.slane %v114, %v124
    %126 = vrot.lane.b32.xlu0 %v125, 32
    %v127 = vpop.permute.xlu0 %126
    %vm129 = vcmask 261120
    %v130 = vsel %vm129, %v120, %v127
    %v131 = vpack.c.bf16 %v130, %v130
    %v140 = vunpack.c.l.b16 %v84
    %v141 = vunpack.c.l.b16 %v85
    %v142 = vunpack.c.l.b16 %v86
    %v143 = vunpack.c.l.b16 %v87
    %v144 = vunpack.c.l.b16 %v88
    %v145 = vunpack.c.l.b16 %v89
    %v146 = vunpack.c.l.b16 %v90
    %v147 = vunpack.c.l.b16 %v91
    %v148 = vpack.c.b16 %v141, %v140
    %v149 = vpack.c.b16 %v143, %v142
    %v150 = vpack.c.b16 %v145, %v144
    %v151 = vpack.c.b16 %v147, %v146
    %vm156 = vcmask 523264
    %v158 = vsel %vm156, %v131, 0
    %160 = vmatprep.subr.bf16.mxu0 0
    %161 = vmatpush1.bf16.msra.mxu0 %v148
    %162 = vmatprep.subr.bf16.mxu0 0
    %163 = vmatpush1.bf16.msra.mxu0 %v149
    %164 = vmatprep.subr.bf16.mxu0 0
    %165 = vmatpush1.bf16.msra.mxu0 %v150
    %166 = vmatprep.subr.bf16.mxu0 0
    %167 = vmatpush1.bf16.msra.mxu0 %v151
    %168 = vmatprep.subr.bf16.mxu0 0
    %169 = vmatpush1.bf16.msra.mxu0 0
    %170 = vmatprep.subr.bf16.mxu0 0
    %171 = vmatpush1.bf16.msra.mxu0 0
    %172 = vmatprep.subr.bf16.mxu0 0
    %173 = vmatpush1.bf16.msra.mxu0 0
    %174 = vmatprep.subr.bf16.mxu0 0
    %175 = vmatpush1.bf16.msra.mxu0 0
    %176 = vmatprep.subr.bf16.mxu0 0
    %177 = vmatpush1.bf16.msra.mxu0 0
    %178 = vmatprep.subr.bf16.mxu0 0
    %179 = vmatpush1.bf16.msra.mxu0 0
    %180 = vmatprep.subr.bf16.mxu0 0
    %181 = vmatpush1.bf16.msra.mxu0 0
    %182 = vmatprep.subr.bf16.mxu0 0
    %183 = vmatpush1.bf16.msra.mxu0 0
    %184 = vmatprep.subr.bf16.mxu0 0
    %185 = vmatpush1.bf16.msra.mxu0 0
    %186 = vmatprep.subr.bf16.mxu0 0
    %187 = vmatpush1.bf16.msra.mxu0 0
    %188 = vmatprep.subr.bf16.mxu0 0
    %189 = vmatpush1.bf16.msra.mxu0 0
    %190 = vmatprep.subr.bf16.mxu0 0
    %191 = vmatpush1.bf16.msra.mxu0 0
    %192 = vmatprep.mubr.bf16.mxu0 0
    %193 = vmatmul.mubr.bf16.gmra.mrb[0].mxu0 %v158
    %v194 = vpop.f32.mrb[0].mxu0
    %v195 = vadd.f32 %v101, %v194
    %v196 = vpop.f32.mrb[0].mxu0
    %v197 = vpop.f32.mrb[0].mxu0
    %v198 = vpop.f32.mrb[0].mxu0
    %199 = vdwg.mxu0
    %v200 = vtanh.pop %v195
    %v201 = vmul.f32 %v200, 0.5
    %v202 = vadd.f32 %v201, 0.5
    %v203 = vsel %vm113, %v200, %v202
    %v205 = vlaneseq
    %v206 = vshrl.u32 %v205, 7
    %v207 = vsub.s32 0, %v206
    %v208 = vrot.slane %v117, %v207
    %209 = vrot.lane.b32.xlu0 %v208, 32
    %v210 = vpop.permute.xlu0 %209
    %v212 = vmul.f32 %v203, %v210
    %214 = vrot.lane.b32.xlu0 %v203, 64
    %v215 = vpop.permute.xlu0 %214
    %v217 = vmul.f32 %v203, %v215
    %219 = vrot.lane.b32.xlu0 %v217, 32
    %v220 = vpop.permute.xlu0 %219
    %v222 = vadd.f32 %v212, %v220
    %v223 = vtanh.pop %v222
    %225 = vrot.lane.b32.xlu0 %v223, 64
    %v226 = vpop.permute.xlu0 %225
    %v228 = vmul.f32 %v203, %v226
    %230 = vrot.lane.b32.xlu0 %v228, 32
    %v231 = vpop.permute.xlu0 %230
    %v234 = vlaneseq
    %v235 = vshrl.u32 %v234, 7
    %v236 = vsub.s32 0, %v235
    %v237 = vrot.slane %v116, %v236
    %238 = vrot.lane.b32.xlu0 %v237, 32
    %v239 = vpop.permute.xlu0 %238
    %v241 = vsel %vm129, %v231, %v239
    %v242 = vpack.c.bf16 %v241, %v241
    %v251 = vunpack.c.l.b16 %v93
    %v252 = vunpack.c.l.b16 %v94
    %v253 = vunpack.c.l.b16 %v95
    %v254 = vunpack.c.l.b16 %v96
    %v255 = vunpack.c.l.b16 %v97
    %v256 = vunpack.c.l.b16 %v98
    %v257 = vunpack.c.l.b16 %v99
    %v258 = vunpack.c.l.b16 %v100
    %v259 = vpack.c.b16 %v252, %v251
    %v260 = vpack.c.b16 %v254, %v253
    %v261 = vpack.c.b16 %v256, %v255
    %v262 = vpack.c.b16 %v258, %v257
    %v268 = vsel %vm156, %v242, 0
    %270 = vmatprep.subr.bf16.mxu0 0
    %271 = vmatpush1.bf16.msra.mxu0 %v259
    %272 = vmatprep.subr.bf16.mxu0 0
    %273 = vmatpush1.bf16.msra.mxu0 %v260
    %274 = vmatprep.subr.bf16.mxu0 0
    %275 = vmatpush1.bf16.msra.mxu0 %v261
    %276 = vmatprep.subr.bf16.mxu0 0
    %277 = vmatpush1.bf16.msra.mxu0 %v262
    %278 = vmatprep.subr.bf16.mxu0 0
    %279 = vmatpush1.bf16.msra.mxu0 0
    %280 = vmatprep.subr.bf16.mxu0 0
    %281 = vmatpush1.bf16.msra.mxu0 0
    %282 = vmatprep.subr.bf16.mxu0 0
    %283 = vmatpush1.bf16.msra.mxu0 0
    %284 = vmatprep.subr.bf16.mxu0 0
    %285 = vmatpush1.bf16.msra.mxu0 0
    %286 = vmatprep.subr.bf16.mxu0 0
    %287 = vmatpush1.bf16.msra.mxu0 0
    %288 = vmatprep.subr.bf16.mxu0 0
    %289 = vmatpush1.bf16.msra.mxu0 0
    %290 = vmatprep.subr.bf16.mxu0 0
    %291 = vmatpush1.bf16.msra.mxu0 0
    %292 = vmatprep.subr.bf16.mxu0 0
    %293 = vmatpush1.bf16.msra.mxu0 0
    %294 = vmatprep.subr.bf16.mxu0 0
    %295 = vmatpush1.bf16.msra.mxu0 0
    %296 = vmatprep.subr.bf16.mxu0 0
    %297 = vmatpush1.bf16.msra.mxu0 0
    %298 = vmatprep.subr.bf16.mxu0 0
    %299 = vmatpush1.bf16.msra.mxu0 0
    %300 = vmatprep.subr.bf16.mxu0 0
    %301 = vmatpush1.bf16.msra.mxu0 0
    %302 = vmatprep.mubr.bf16.mxu0 0
    %303 = vmatmul.mubr.bf16.gmra.mrb[0].mxu0 %v268
    %v304 = vpop.f32.mrb[0].mxu0
    %v305 = vadd.f32 %v103, %v304
    %v306 = vpop.f32.mrb[0].mxu0
    %v307 = vpop.f32.mrb[0].mxu0
    %v308 = vpop.f32.mrb[0].mxu0
    %309 = vdwg.mxu0
    %v310 = vtanh.pop %v305
    %v311 = vmul.f32 %v310, 0.5
    %v312 = vadd.f32 %v311, 0.5
    %v313 = vsel %vm113, %v310, %v312
    %v315 = vlaneseq
    %v316 = vshrl.u32 %v315, 7
    %v317 = vsub.s32 0, %v316
    %v318 = vrot.slane %v119, %v317
    %319 = vrot.lane.b32.xlu0 %v318, 32
    %v320 = vpop.permute.xlu0 %319
    %v322 = vmul.f32 %v313, %v320
    %324 = vrot.lane.b32.xlu0 %v313, 64
    %v325 = vpop.permute.xlu0 %324
    %v327 = vmul.f32 %v313, %v325
    %329 = vrot.lane.b32.xlu0 %v327, 32
    %v330 = vpop.permute.xlu0 %329
    %v332 = vadd.f32 %v322, %v330
    %v333 = vtanh.pop %v332
    %335 = vrot.lane.b32.xlu0 %v333, 64
    %v336 = vpop.permute.xlu0 %335
    %v338 = vmul.f32 %v313, %v336
    %v339 = vpack.c.bf16 %v338, %v338
    %341 = vrot.lane.b32.xlu0 %v339, 32
    %v342 = vpop.permute.xlu0 %341
    %v347 = vunpack.c.l.b16 %v104
    %v348 = vunpack.c.l.b16 %v105
    %v349 = vunpack.c.l.b16 %v106
    %v350 = vunpack.c.l.b16 %v107
    %v351 = vpack.c.b16 %v348, %v347
    %v352 = vpack.c.b16 %v350, %v349
    %v356 = vsel %vm129, %v342, 0
    %358 = vmatprep.subr.bf16.mxu0 0
    %359 = vmatpush1.bf16.msra.mxu0 %v351
    %360 = vmatprep.subr.bf16.mxu0 0
    %361 = vmatpush1.bf16.msra.mxu0 %v352
    %362 = vmatprep.subr.bf16.mxu0 0
    %363 = vmatpush1.bf16.msra.mxu0 0
    %364 = vmatprep.subr.bf16.mxu0 0
    %365 = vmatpush1.bf16.msra.mxu0 0
    %366 = vmatprep.subr.bf16.mxu0 0
    %367 = vmatpush1.bf16.msra.mxu0 0
    %368 = vmatprep.subr.bf16.mxu0 0
    %369 = vmatpush1.bf16.msra.mxu0 0
    %370 = vmatprep.subr.bf16.mxu0 0
    %371 = vmatpush1.bf16.msra.mxu0 0
    %372 = vmatprep.subr.bf16.mxu0 0
    %373 = vmatpush1.bf16.msra.mxu0 0
    %374 = vmatprep.subr.bf16.mxu0 0
    %375 = vmatpush1.bf16.msra.mxu0 0
    %376 = vmatprep.subr.bf16.mxu0 0
    %377 = vmatpush1.bf16.msra.mxu0 0
    %378 = vmatprep.subr.bf16.mxu0 0
    %379 = vmatpush1.bf16.msra.mxu0 0
    %380 = vmatprep.subr.bf16.mxu0 0
    %381 = vmatpush1.bf16.msra.mxu0 0
    %382 = vmatprep.subr.bf16.mxu0 0
    %383 = vmatpush1.bf16.msra.mxu0 0
    %384 = vmatprep.subr.bf16.mxu0 0
    %385 = vmatpush1.bf16.msra.mxu0 0
    %386 = vmatprep.subr.bf16.mxu0 0
    %387 = vmatpush1.bf16.msra.mxu0 0
    %388 = vmatprep.subr.bf16.mxu0 0
    %389 = vmatpush1.bf16.msra.mxu0 0
    %390 = vmatprep.mubr.bf16.mxu0 0
    %391 = vmatmul.mubr.bf16.gmra.mrb[0].mxu0 %v356
    %v392 = vpop.f32.mrb[0].mxu0
    %v393 = vadd.f32 %v108, %v392
    %v394 = vpop.f32.mrb[0].mxu0
    %v395 = vpop.f32.mrb[0].mxu0
    %v396 = vpop.f32.mrb[0].mxu0
    %397 = vdwg.mxu0
    %398 = vst [vmem:[#allocation8] sm:$0x1] %v393
    %v399 = vld [vmem:[#allocation2 + $0x1] sm:$0x1]
    %400 = vrot.lane.b32.xlu0 %v228, 64
    %v401 = vpop.permute.xlu0 %400
    %v403 = vsel %vm129, %v399, %v401
    %v404 = vpack.c.bf16 %v403, %v403
    %v406 = vsel %vm156, %v404, 0
    %408 = vmatprep.subr.bf16.mxu0 0
    %409 = vmatpush1.bf16.msra.mxu0 %v148
    %410 = vmatprep.subr.bf16.mxu0 0
    %411 = vmatpush1.bf16.msra.mxu0 %v149
    %412 = vmatprep.subr.bf16.mxu0 0
    %413 = vmatpush1.bf16.msra.mxu0 %v150
    %414 = vmatprep.subr.bf16.mxu0 0
    %415 = vmatpush1.bf16.msra.mxu0 %v151
    %416 = vmatprep.subr.bf16.mxu0 0
    %417 = vmatpush1.bf16.msra.mxu0 0
    %418 = vmatprep.subr.bf16.mxu0 0
    %419 = vmatpush1.bf16.msra.mxu0 0
    %420 = vmatprep.subr.bf16.mxu0 0
    %421 = vmatpush1.bf16.msra.mxu0 0
    %422 = vmatprep.subr.bf16.mxu0 0
    %423 = vmatpush1.bf16.msra.mxu0 0
    %424 = vmatprep.subr.bf16.mxu0 0
    %425 = vmatpush1.bf16.msra.mxu0 0
    %426 = vmatprep.subr.bf16.mxu0 0
    %427 = vmatpush1.bf16.msra.mxu0 0
    %428 = vmatprep.subr.bf16.mxu0 0
    %429 = vmatpush1.bf16.msra.mxu0 0
    %430 = vmatprep.subr.bf16.mxu0 0
    %431 = vmatpush1.bf16.msra.mxu0 0
    %432 = vmatprep.subr.bf16.mxu0 0
    %433 = vmatpush1.bf16.msra.mxu0 0
    %434 = vmatprep.subr.bf16.mxu0 0
    %435 = vmatpush1.bf16.msra.mxu0 0
    %436 = vmatprep.subr.bf16.mxu0 0
    %437 = vmatpush1.bf16.msra.mxu0 0
    %438 = vmatprep.subr.bf16.mxu0 0
    %439 = vmatpush1.bf16.msra.mxu0 0
    %440 = vmatprep.mubr.bf16.mxu0 0
    %441 = vmatmul.mubr.bf16.gmra.mrb[0].mxu0 %v406
    %v442 = vpop.f32.mrb[0].mxu0
    %v443 = vadd.f32 %v101, %v442
    %v444 = vpop.f32.mrb[0].mxu0
    %v445 = vpop.f32.mrb[0].mxu0
    %v446 = vpop.f32.mrb[0].mxu0
    %447 = vdwg.mxu0
    %v448 = vtanh.pop %v443
    %v449 = vmul.f32 %v448, 0.5
    %v450 = vadd.f32 %v449, 0.5
    %v451 = vsel %vm113, %v448, %v450
    %v452 = vmul.f32 %v451, %v222
    %454 = vrot.lane.b32.xlu0 %v451, 64
    %v455 = vpop.permute.xlu0 %454
    %v457 = vmul.f32 %v451, %v455
    %459 = vrot.lane.b32.xlu0 %v457, 32
    %v460 = vpop.permute.xlu0 %459
    %v462 = vadd.f32 %v452, %v460
    %v463 = vtanh.pop %v462
    %465 = vrot.lane.b32.xlu0 %v463, 64
    %v466 = vpop.permute.xlu0 %465
    %v468 = vmul.f32 %v451, %v466
    %470 = vrot.lane.b32.xlu0 %v468, 32
    %v471 = vpop.permute.xlu0 %470
    %474 = vrot.lane.b32.xlu0 %v338, 64
    %v475 = vpop.permute.xlu0 %474
    %v477 = vsel %vm129, %v471, %v475
    %v478 = vpack.c.bf16 %v477, %v477
    %v480 = vsel %vm156, %v478, 0
    %482 = vmatprep.subr.bf16.mxu0 0
    %483 = vmatpush1.bf16.msra.mxu0 %v259
    %484 = vmatprep.subr.bf16.mxu0 0
    %485 = vmatpush1.bf16.msra.mxu0 %v260
    %486 = vmatprep.subr.bf16.mxu0 0
    %487 = vmatpush1.bf16.msra.mxu0 %v261
    %488 = vmatprep.subr.bf16.mxu0 0
    %489 = vmatpush1.bf16.msra.mxu0 %v262
    %490 = vmatprep.subr.bf16.mxu0 0
    %491 = vmatpush1.bf16.msra.mxu0 0
    %492 = vmatprep.subr.bf16.mxu0 0
    %493 = vmatpush1.bf16.msra.mxu0 0
    %494 = vmatprep.subr.bf16.mxu0 0
    %495 = vmatpush1.bf16.msra.mxu0 0
    %496 = vmatprep.subr.bf16.mxu0 0
    %497 = vmatpush1.bf16.msra.mxu0 0
    %498 = vmatprep.subr.bf16.mxu0 0
    %499 = vmatpush1.bf16.msra.mxu0 0
    %500 = vmatprep.subr.bf16.mxu0 0
    %501 = vmatpush1.bf16.msra.mxu0 0
    %502 = vmatprep.subr.bf16.mxu0 0
    %503 = vmatpush1.bf16.msra.mxu0 0
    %504 = vmatprep.subr.bf16.mxu0 0
    %505 = vmatpush1.bf16.msra.mxu0 0
    %506 = vmatprep.subr.bf16.mxu0 0
    %507 = vmatpush1.bf16.msra.mxu0 0
    %508 = vmatprep.subr.bf16.mxu0 0
    %509 = vmatpush1.bf16.msra.mxu0 0
    %510 = vmatprep.subr.bf16.mxu0 0
    %511 = vmatpush1.bf16.msra.mxu0 0
    %512 = vmatprep.subr.bf16.mxu0 0
    %513 = vmatpush1.bf16.msra.mxu0 0
    %514 = vmatprep.mubr.bf16.mxu0 0
    %515 = vmatmul.mubr.bf16.gmra.mrb[0].mxu0 %v480
    %v516 = vpop.f32.mrb[0].mxu0
    %v517 = vadd.f32 %v103, %v516
    %v518 = vpop.f32.mrb[0].mxu0
    %v519 = vpop.f32.mrb[0].mxu0
    %v520 = vpop.f32.mrb[0].mxu0
    %521 = vdwg.mxu0
    %v522 = vtanh.pop %v517
    %v523 = vmul.f32 %v522, 0.5
    %v524 = vadd.f32 %v523, 0.5
    %v525 = vsel %vm113, %v522, %v524
    %v526 = vmul.f32 %v525, %v332
    %528 = vrot.lane.b32.xlu0 %v525, 64
    %v529 = vpop.permute.xlu0 %528
    %v531 = vmul.f32 %v525, %v529
    %533 = vrot.lane.b32.xlu0 %v531, 32
    %v534 = vpop.permute.xlu0 %533
    %v536 = vadd.f32 %v526, %v534
    %v537 = vtanh.pop %v536
    %539 = vrot.lane.b32.xlu0 %v537, 64
    %v540 = vpop.permute.xlu0 %539
    %v542 = vmul.f32 %v525, %v540
    %v543 = vpack.c.bf16 %v542, %v542
    %545 = vrot.lane.b32.xlu0 %v543, 32
    %v546 = vpop.permute.xlu0 %545
    %v548 = vsel %vm129, %v546, 0
    %550 = vmatprep.subr.bf16.mxu0 0
    %551 = vmatpush1.bf16.msra.mxu0 %v351
    %552 = vmatprep.subr.bf16.mxu0 0
    %553 = vmatpush1.bf16.msra.mxu0 %v352
    %554 = vmatprep.subr.bf16.mxu0 0
    %555 = vmatpush1.bf16.msra.mxu0 0
    %556 = vmatprep.subr.bf16.mxu0 0
    %557 = vmatpush1.bf16.msra.mxu0 0
    %558 = vmatprep.subr.bf16.mxu0 0
    %559 = vmatpush1.bf16.msra.mxu0 0
    %560 = vmatprep.subr.bf16.mxu0 0
    %561 = vmatpush1.bf16.msra.mxu0 0
    %562 = vmatprep.subr.bf16.mxu0 0
    %563 = vmatpush1.bf16.msra.mxu0 0
    %564 = vmatprep.subr.bf16.mxu0 0
    %565 = vmatpush1.bf16.msra.mxu0 0
    %566 = vmatprep.subr.bf16.mxu0 0
    %567 = vmatpush1.bf16.msra.mxu0 0
    %568 = vmatprep.subr.bf16.mxu0 0
    %569 = vmatpush1.bf16.msra.mxu0 0
    %570 = vmatprep.subr.bf16.mxu0 0
    %571 = vmatpush1.bf16.msra.mxu0 0
    %572 = vmatprep.subr.bf16.mxu0 0
    %573 = vmatpush1.bf16.msra.mxu0 0
    %574 = vmatprep.subr.bf16.mxu0 0
    %575 = vmatpush1.bf16.msra.mxu0 0
    %576 = vmatprep.subr.bf16.mxu0 0
    %577 = vmatpush1.bf16.msra.mxu0 0
    %578 = vmatprep.subr.bf16.mxu0 0
    %579 = vmatpush1.bf16.msra.mxu0 0
    %580 = vmatprep.subr.bf16.mxu0 0
    %581 = vmatpush1.bf16.msra.mxu0 0
    %582 = vmatprep.mubr.bf16.mxu0 0
    %583 = vmatmul.mubr.bf16.gmra.mrb[0].mxu0 %v548
    %v584 = vpop.f32.mrb[0].mxu0
    %v585 = vadd.f32 %v108, %v584
    %v586 = vpop.f32.mrb[0].mxu0
    %v587 = vpop.f32.mrb[0].mxu0
    %v588 = vpop.f32.mrb[0].mxu0
    %589 = vdwg.mxu0
    %590 = vst [vmem:[#allocation8 + $0x1] sm:$0x1] %v585
    %v591 = vld [vmem:[#allocation2 + $0x2] sm:$0x1]
    %592 = vrot.lane.b32.xlu0 %v468, 64
    %v593 = vpop.permute.xlu0 %592
    %v595 = vsel %vm129, %v591, %v593
    %v596 = vpack.c.bf16 %v595, %v595
    %v598 = vsel %vm156, %v596, 0
    %600 = vmatprep.subr.bf16.mxu0 0
    %601 = vmatpush1.bf16.msra.mxu0 %v148
    %602 = vmatprep.subr.bf16.mxu0 0
    %603 = vmatpush1.bf16.msra.mxu0 %v149
    %604 = vmatprep.subr.bf16.mxu0 0
    %605 = vmatpush1.bf16.msra.mxu0 %v150
    %606 = vmatprep.subr.bf16.mxu0 0
    %607 = vmatpush1.bf16.msra.mxu0 %v151
    %608 = vmatprep.subr.bf16.mxu0 0
    %609 = vmatpush1.bf16.msra.mxu0 0
    %610 = vmatprep.subr.bf16.mxu0 0
    %611 = vmatpush1.bf16.msra.mxu0 0
    %612 = vmatprep.subr.bf16.mxu0 0
    %613 = vmatpush1.bf16.msra.mxu0 0
    %614 = vmatprep.subr.bf16.mxu0 0
    %615 = vmatpush1.bf16.msra.mxu0 0
    %616 = vmatprep.subr.bf16.mxu0 0
    %617 = vmatpush1.bf16.msra.mxu0 0
    %618 = vmatprep.subr.bf16.mxu0 0
    %619 = vmatpush1.bf16.msra.mxu0 0
    %620 = vmatprep.subr.bf16.mxu0 0
    %621 = vmatpush1.bf16.msra.mxu0 0
    %622 = vmatprep.subr.bf16.mxu0 0
    %623 = vmatpush1.bf16.msra.mxu0 0
    %624 = vmatprep.subr.bf16.mxu0 0
    %625 = vmatpush1.bf16.msra.mxu0 0
    %626 = vmatprep.subr.bf16.mxu0 0
    %627 = vmatpush1.bf16.msra.mxu0 0
    %628 = vmatprep.subr.bf16.mxu0 0
    %629 = vmatpush1.bf16.msra.mxu0 0
    %630 = vmatprep.subr.bf16.mxu0 0
    %631 = vmatpush1.bf16.msra.mxu0 0
    %632 = vmatprep.mubr.bf16.mxu0 0
    %633 = vmatmul.mubr.bf16.gmra.mrb[0].mxu0 %v598
    %v634 = vpop.f32.mrb[0].mxu0
    %v635 = vadd.f32 %v101, %v634
    %v636 = vpop.f32.mrb[0].mxu0
    %v637 = vpop.f32.mrb[0].mxu0
    %v638 = vpop.f32.mrb[0].mxu0
    %639 = vdwg.mxu0
    %v640 = vtanh.pop %v635
    %v641 = vmul.f32 %v640, 0.5
    %v642 = vadd.f32 %v641, 0.5
    %v643 = vsel %vm113, %v640, %v642
    %v644 = vmul.f32 %v643, %v462
    %646 = vrot.lane.b32.xlu0 %v643, 64
    %v647 = vpop.permute.xlu0 %646
    %v649 = vmul.f32 %v643, %v647
    %651 = vrot.lane.b32.xlu0 %v649, 32
    %v652 = vpop.permute.xlu0 %651
    %v654 = vadd.f32 %v644, %v652
    %v655 = vtanh.pop %v654
    %657 = vrot.lane.b32.xlu0 %v655, 64
    %v658 = vpop.permute.xlu0 %657
    %v660 = vmul.f32 %v643, %v658
    %662 = vrot.lane.b32.xlu0 %v660, 32
    %v663 = vpop.permute.xlu0 %662
    %666 = vrot.lane.b32.xlu0 %v542, 64
    %v667 = vpop.permute.xlu0 %666
    %v669 = vsel %vm129, %v663, %v667
    %v670 = vpack.c.bf16 %v669, %v669
    %v672 = vsel %vm156, %v670, 0
    %674 = vmatprep.subr.bf16.mxu0 0
    %675 = vmatpush1.bf16.msra.mxu0 %v259
    %676 = vmatprep.subr.bf16.mxu0 0
    %677 = vmatpush1.bf16.msra.mxu0 %v260
    %678 = vmatprep.subr.bf16.mxu0 0
    %679 = vmatpush1.bf16.msra.mxu0 %v261
    %680 = vmatprep.subr.bf16.mxu0 0
    %681 = vmatpush1.bf16.msra.mxu0 %v262
    %682 = vmatprep.subr.bf16.mxu0 0
    %683 = vmatpush1.bf16.msra.mxu0 0
    %684 = vmatprep.subr.bf16.mxu0 0
    %685 = vmatpush1.bf16.msra.mxu0 0
    %686 = vmatprep.subr.bf16.mxu0 0
    %687 = vmatpush1.bf16.msra.mxu0 0
    %688 = vmatprep.subr.bf16.mxu0 0
    %689 = vmatpush1.bf16.msra.mxu0 0
    %690 = vmatprep.subr.bf16.mxu0 0
    %691 = vmatpush1.bf16.msra.mxu0 0
    %692 = vmatprep.subr.bf16.mxu0 0
    %693 = vmatpush1.bf16.msra.mxu0 0
    %694 = vmatprep.subr.bf16.mxu0 0
    %695 = vmatpush1.bf16.msra.mxu0 0
    %696 = vmatprep.subr.bf16.mxu0 0
    %697 = vmatpush1.bf16.msra.mxu0 0
    %698 = vmatprep.subr.bf16.mxu0 0
    %699 = vmatpush1.bf16.msra.mxu0 0
    %700 = vmatprep.subr.bf16.mxu0 0
    %701 = vmatpush1.bf16.msra.mxu0 0
    %702 = vmatprep.subr.bf16.mxu0 0
    %703 = vmatpush1.bf16.msra.mxu0 0
    %704 = vmatprep.subr.bf16.mxu0 0
    %705 = vmatpush1.bf16.msra.mxu0 0
    %706 = vmatprep.mubr.bf16.mxu0 0
    %707 = vmatmul.mubr.bf16.gmra.mrb[0].mxu0 %v672
    %v708 = vpop.f32.mrb[0].mxu0
    %v709 = vadd.f32 %v103, %v708
    %v710 = vpop.f32.mrb[0].mxu0
    %v711 = vpop.f32.mrb[0].mxu0
    %v712 = vpop.f32.mrb[0].mxu0
    %713 = vdwg.mxu0
    %v714 = vtanh.pop %v709
    %v715 = vmul.f32 %v714, 0.5
    %v716 = vadd.f32 %v715, 0.5
    %v717 = vsel %vm113, %v714, %v716
    %v718 = vmul.f32 %v717, %v536
    %720 = vrot.lane.b32.xlu0 %v717, 64
    %v721 = vpop.permute.xlu0 %720
    %v723 = vmul.f32 %v717, %v721
    %725 = vrot.lane.b32.xlu0 %v723, 32
    %v726 = vpop.permute.xlu0 %725
    %v728 = vadd.f32 %v718, %v726
    %v729 = vtanh.pop %v728
    %731 = vrot.lane.b32.xlu0 %v729, 64
    %v732 = vpop.permute.xlu0 %731
    %v734 = vmul.f32 %v717, %v732
    %v735 = vpack.c.bf16 %v734, %v734
    %737 = vrot.lane.b32.xlu0 %v735, 32
    %v738 = vpop.permute.xlu0 %737
    %v740 = vsel %vm129, %v738, 0
    %742 = vmatprep.subr.bf16.mxu0 0
    %743 = vmatpush1.bf16.msra.mxu0 %v351
    %744 = vmatprep.subr.bf16.mxu0 0
    %745 = vmatpush1.bf16.msra.mxu0 %v352
    %746 = vmatprep.subr.bf16.mxu0 0
    %747 = vmatpush1.bf16.msra.mxu0 0
    %748 = vmatprep.subr.bf16.mxu0 0
    %749 = vmatpush1.bf16.msra.mxu0 0
    %750 = vmatprep.subr.bf16.mxu0 0
    %751 = vmatpush1.bf16.msra.mxu0 0
    %752 = vmatprep.subr.bf16.mxu0 0
    %753 = vmatpush1.bf16.msra.mxu0 0
    %754 = vmatprep.subr.bf16.mxu0 0
    %755 = vmatpush1.bf16.msra.mxu0 0
    %756 = vmatprep.subr.bf16.mxu0 0
    %757 = vmatpush1.bf16.msra.mxu0 0
    %758 = vmatprep.subr.bf16.mxu0 0
    %759 = vmatpush1.bf16.msra.mxu0 0
    %760 = vmatprep.subr.bf16.mxu0 0
    %761 = vmatpush1.bf16.msra.mxu0 0
    %762 = vmatprep.subr.bf16.mxu0 0
    %763 = vmatpush1.bf16.msra.mxu0 0
    %764 = vmatprep.subr.bf16.mxu0 0
    %765 = vmatpush1.bf16.msra.mxu0 0
    %766 = vmatprep.subr.bf16.mxu0 0
    %767 = vmatpush1.bf16.msra.mxu0 0
    %768 = vmatprep.subr.bf16.mxu0 0
    %769 = vmatpush1.bf16.msra.mxu0 0
    %770 = vmatprep.subr.bf16.mxu0 0
    %771 = vmatpush1.bf16.msra.mxu0 0
    %772 = vmatprep.subr.bf16.mxu0 0
    %773 = vmatpush1.bf16.msra.mxu0 0
    %774 = vmatprep.mubr.bf16.mxu0 0
    %775 = vmatmul.mubr.bf16.gmra.mrb[0].mxu0 %v740
    %v776 = vpop.f32.mrb[0].mxu0
    %v777 = vadd.f32 %v108, %v776
    %v778 = vpop.f32.mrb[0].mxu0
    %v779 = vpop.f32.mrb[0].mxu0
    %v780 = vpop.f32.mrb[0].mxu0
    %781 = vdwg.mxu0
    %782 = vst [vmem:[#allocation8 + $0x2] sm:$0x1] %v777
    %v783 = vld [vmem:[#allocation2 + $0x3] sm:$0x1]
    %784 = vrot.lane.b32.xlu0 %v660, 64
    %v785 = vpop.permute.xlu0 %784
    %v787 = vsel %vm129, %v783, %v785
    %v788 = vpack.c.bf16 %v787, %v787
    %v790 = vsel %vm156, %v788, 0
    %792 = vmatprep.subr.bf16.mxu0 0
    %793 = vmatpush1.bf16.msra.mxu0 %v148
    %794 = vmatprep.subr.bf16.mxu0 0
    %795 = vmatpush1.bf16.msra.mxu0 %v149
    %796 = vmatprep.subr.bf16.mxu0 0
    %797 = vmatpush1.bf16.msra.mxu0 %v150
    %798 = vmatprep.subr.bf16.mxu0 0
    %799 = vmatpush1.bf16.msra.mxu0 %v151
    %800 = vmatprep.subr.bf16.mxu0 0
    %801 = vmatpush1.bf16.msra.mxu0 0
    %802 = vmatprep.subr.bf16.mxu0 0
    %803 = vmatpush1.bf16.msra.mxu0 0
    %804 = vmatprep.subr.bf16.mxu0 0
    %805 = vmatpush1.bf16.msra.mxu0 0
    %806 = vmatprep.subr.bf16.mxu0 0
    %807 = vmatpush1.bf16.msra.mxu0 0
    %808 = vmatprep.subr.bf16.mxu0 0
    %809 = vmatpush1.bf16.msra.mxu0 0
    %810 = vmatprep.subr.bf16.mxu0 0
    %811 = vmatpush1.bf16.msra.mxu0 0
    %812 = vmatprep.subr.bf16.mxu0 0
    %813 = vmatpush1.bf16.msra.mxu0 0
    %814 = vmatprep.subr.bf16.mxu0 0
    %815 = vmatpush1.bf16.msra.mxu0 0
    %816 = vmatprep.subr.bf16.mxu0 0
    %817 = vmatpush1.bf16.msra.mxu0 0
    %818 = vmatprep.subr.bf16.mxu0 0
    %819 = vmatpush1.bf16.msra.mxu0 0
    %820 = vmatprep.subr.bf16.mxu0 0
    %821 = vmatpush1.bf16.msra.mxu0 0
    %822 = vmatprep.subr.bf16.mxu0 0
    %823 = vmatpush1.bf16.msra.mxu0 0
    %824 = vmatprep.mubr.bf16.mxu0 0
    %825 = vmatmul.mubr.bf16.gmra.mrb[0].mxu0 %v790
    %v826 = vpop.f32.mrb[0].mxu0
    %v827 = vadd.f32 %v101, %v826
    %v828 = vpop.f32.mrb[0].mxu0
    %v829 = vpop.f32.mrb[0].mxu0
    %v830 = vpop.f32.mrb[0].mxu0
    %831 = vdwg.mxu0
    %v832 = vtanh.pop %v827
    %v833 = vmul.f32 %v832, 0.5
    %v834 = vadd.f32 %v833, 0.5
    %v835 = vsel %vm113, %v832, %v834
    %v836 = vmul.f32 %v835, %v654
    %838 = vrot.lane.b32.xlu0 %v835, 64
    %v839 = vpop.permute.xlu0 %838
    %v841 = vmul.f32 %v835, %v839
    %843 = vrot.lane.b32.xlu0 %v841, 32
    %v844 = vpop.permute.xlu0 %843
    %v846 = vadd.f32 %v836, %v844
    %v847 = vtanh.pop %v846
    %849 = vrot.lane.b32.xlu0 %v847, 64
    %v850 = vpop.permute.xlu0 %849
    %v852 = vmul.f32 %v835, %v850
    %854 = vrot.lane.b32.xlu0 %v852, 32
    %v855 = vpop.permute.xlu0 %854
    %858 = vrot.lane.b32.xlu0 %v734, 64
    %v859 = vpop.permute.xlu0 %858
    %v861 = vsel %vm129, %v855, %v859
    %v862 = vpack.c.bf16 %v861, %v861
    %v864 = vsel %vm156, %v862, 0
    %866 = vmatprep.subr.bf16.mxu0 0
    %867 = vmatpush1.bf16.msra.mxu0 %v259
    %868 = vmatprep.subr.bf16.mxu0 0
    %869 = vmatpush1.bf16.msra.mxu0 %v260
    %870 = vmatprep.subr.bf16.mxu0 0
    %871 = vmatpush1.bf16.msra.mxu0 %v261
    %872 = vmatprep.subr.bf16.mxu0 0
    %873 = vmatpush1.bf16.msra.mxu0 %v262
    %874 = vmatprep.subr.bf16.mxu0 0
    %875 = vmatpush1.bf16.msra.mxu0 0
    %876 = vmatprep.subr.bf16.mxu0 0
    %877 = vmatpush1.bf16.msra.mxu0 0
    %878 = vmatprep.subr.bf16.mxu0 0
    %879 = vmatpush1.bf16.msra.mxu0 0
    %880 = vmatprep.subr.bf16.mxu0 0
    %881 = vmatpush1.bf16.msra.mxu0 0
    %882 = vmatprep.subr.bf16.mxu0 0
    %883 = vmatpush1.bf16.msra.mxu0 0
    %884 = vmatprep.subr.bf16.mxu0 0
    %885 = vmatpush1.bf16.msra.mxu0 0
    %886 = vmatprep.subr.bf16.mxu0 0
    %887 = vmatpush1.bf16.msra.mxu0 0
    %888 = vmatprep.subr.bf16.mxu0 0
    %889 = vmatpush1.bf16.msra.mxu0 0
    %890 = vmatprep.subr.bf16.mxu0 0
    %891 = vmatpush1.bf16.msra.mxu0 0
    %892 = vmatprep.subr.bf16.mxu0 0
    %893 = vmatpush1.bf16.msra.mxu0 0
    %894 = vmatprep.subr.bf16.mxu0 0
    %895 = vmatpush1.bf16.msra.mxu0 0
    %896 = vmatprep.subr.bf16.mxu0 0
    %897 = vmatpush1.bf16.msra.mxu0 0
    %898 = vmatprep.mubr.bf16.mxu0 0
    %899 = vmatmul.mubr.bf16.gmra.mrb[0].mxu0 %v864
    %v900 = vpop.f32.mrb[0].mxu0
    %v901 = vadd.f32 %v103, %v900
    %v902 = vpop.f32.mrb[0].mxu0
    %v903 = vpop.f32.mrb[0].mxu0
    %v904 = vpop.f32.mrb[0].mxu0
    %905 = vdwg.mxu0
    %v906 = vtanh.pop %v901
    %v907 = vmul.f32 %v906, 0.5
    %v908 = vadd.f32 %v907, 0.5
    %v909 = vsel %vm113, %v906, %v908
    %v910 = vmul.f32 %v909, %v728
    %912 = vrot.lane.b32.xlu0 %v909, 64
    %v913 = vpop.permute.xlu0 %912
    %v915 = vmul.f32 %v909, %v913
    %917 = vrot.lane.b32.xlu0 %v915, 32
    %v918 = vpop.permute.xlu0 %917
    %v920 = vadd.f32 %v910, %v918
    %v921 = vtanh.pop %v920
    %923 = vrot.lane.b32.xlu0 %v921, 64
    %v924 = vpop.permute.xlu0 %923
    %v926 = vmul.f32 %v909, %v924
    %v927 = vpack.c.bf16 %v926, %v926
    %929 = vrot.lane.b32.xlu0 %v927, 32
    %v930 = vpop.permute.xlu0 %929
    %v932 = vsel %vm129, %v930, 0
    %934 = vmatprep.subr.bf16.mxu0 0
    %935 = vmatpush1.bf16.msra.mxu0 %v351
    %936 = vmatprep.subr.bf16.mxu0 0
    %937 = vmatpush1.bf16.msra.mxu0 %v352
    %938 = vmatprep.subr.bf16.mxu0 0
    %939 = vmatpush1.bf16.msra.mxu0 0
    %940 = vmatprep.subr.bf16.mxu0 0
    %941 = vmatpush1.bf16.msra.mxu0 0
    %942 = vmatprep.subr.bf16.mxu0 0
    %943 = vmatpush1.bf16.msra.mxu0 0
    %944 = vmatprep.subr.bf16.mxu0 0
    %945 = vmatpush1.bf16.msra.mxu0 0
    %946 = vmatprep.subr.bf16.mxu0 0
    %947 = vmatpush1.bf16.msra.mxu0 0
    %948 = vmatprep.subr.bf16.mxu0 0
    %949 = vmatpush1.bf16.msra.mxu0 0
    %950 = vmatprep.subr.bf16.mxu0 0
    %951 = vmatpush1.bf16.msra.mxu0 0
    %952 = vmatprep.subr.bf16.mxu0 0
    %953 = vmatpush1.bf16.msra.mxu0 0
    %954 = vmatprep.subr.bf16.mxu0 0
    %955 = vmatpush1.bf16.msra.mxu0 0
    %956 = vmatprep.subr.bf16.mxu0 0
    %957 = vmatpush1.bf16.msra.mxu0 0
    %958 = vmatprep.subr.bf16.mxu0 0
    %959 = vmatpush1.bf16.msra.mxu0 0
    %960 = vmatprep.subr.bf16.mxu0 0
    %961 = vmatpush1.bf16.msra.mxu0 0
    %962 = vmatprep.subr.bf16.mxu0 0
    %963 = vmatpush1.bf16.msra.mxu0 0
    %964 = vmatprep.subr.bf16.mxu0 0
    %965 = vmatpush1.bf16.msra.mxu0 0
    %966 = vmatprep.mubr.bf16.mxu0 0
    %967 = vmatmul.mubr.bf16.gmra.mrb[0].mxu0 %v932
    %v968 = vpop.f32.mrb[0].mxu0
    %v969 = vadd.f32 %v108, %v968
    %v970 = vpop.f32.mrb[0].mxu0
    %v971 = vpop.f32.mrb[0].mxu0
    %v972 = vpop.f32.mrb[0].mxu0
    %973 = vdwg.mxu0
    %974 = vst [vmem:[#allocation8 + $0x3] sm:$0x1] %v969
    %v975 = vld [vmem:[#allocation2 + $0x4] sm:$0x1]
    %976 = vrot.lane.b32.xlu0 %v852, 64
    %v977 = vpop.permute.xlu0 %976
    %v979 = vsel %vm129, %v975, %v977
    %v980 = vpack.c.bf16 %v979, %v979
    %v982 = vsel %vm156, %v980, 0
    %984 = vmatprep.subr.bf16.mxu0 0
    %985 = vmatpush1.bf16.msra.mxu0 %v148
    %986 = vmatprep.subr.bf16.mxu0 0
    %987 = vmatpush1.bf16.msra.mxu0 %v149
    %988 = vmatprep.subr.bf16.mxu0 0
    %989 = vmatpush1.bf16.msra.mxu0 %v150
    %990 = vmatprep.subr.bf16.mxu0 0
    %991 = vmatpush1.bf16.msra.mxu0 %v151
    %992 = vmatprep.subr.bf16.mxu0 0
    %993 = vmatpush1.bf16.msra.mxu0 0
    %994 = vmatprep.subr.bf16.mxu0 0
    %995 = vmatpush1.bf16.msra.mxu0 0
    %996 = vmatprep.subr.bf16.mxu0 0
    %997 = vmatpush1.bf16.msra.mxu0 0
    %998 = vmatprep.subr.bf16.mxu0 0
    %999 = vmatpush1.bf16.msra.mxu0 0
    %1000 = vmatprep.subr.bf16.mxu0 0
    %1001 = vmatpush1.bf16.msra.mxu0 0
    %1002 = vmatprep.subr.bf16.mxu0 0
    %1003 = vmatpush1.bf16.msra.mxu0 0
    %1004 = vmatprep.subr.bf16.mxu0 0
    %1005 = vmatpush1.bf16.msra.mxu0 0
    %1006 = vmatprep.subr.bf16.mxu0 0
    %1007 = vmatpush1.bf16.msra.mxu0 0
    %1008 = vmatprep.subr.bf16.mxu0 0
    %1009 = vmatpush1.bf16.msra.mxu0 0
    %1010 = vmatprep.subr.bf16.mxu0 0
    %1011 = vmatpush1.bf16.msra.mxu0 0
    %1012 = vmatprep.subr.bf16.mxu0 0
    %1013 = vmatpush1.bf16.msra.mxu0 0
    %1014 = vmatprep.subr.bf16.mxu0 0
    %1015 = vmatpush1.bf16.msra.mxu0 0
    %1016 = vmatprep.mubr.bf16.mxu0 0
    %1017 = vmatmul.mubr.bf16.gmra.mrb[0].mxu0 %v982
    %v1018 = vpop.f32.mrb[0].mxu0
    %v1019 = vadd.f32 %v101, %v1018
    %v1020 = vpop.f32.mrb[0].mxu0
    %v1021 = vpop.f32.mrb[0].mxu0
    %v1022 = vpop.f32.mrb[0].mxu0
    %1023 = vdwg.mxu0
    %v1024 = vtanh.pop %v1019
    %v1025 = vmul.f32 %v1024, 0.5
    %v1026 = vadd.f32 %v1025, 0.5
    %v1027 = vsel %vm113, %v1024, %v1026
    %v1028 = vmul.f32 %v1027, %v846
    %1030 = vrot.lane.b32.xlu0 %v1027, 64
    %v1031 = vpop.permute.xlu0 %1030
    %v1033 = vmul.f32 %v1027, %v1031
    %1035 = vrot.lane.b32.xlu0 %v1033, 32
    %v1036 = vpop.permute.xlu0 %1035
    %v1038 = vadd.f32 %v1028, %v1036
    %v1039 = vtanh.pop %v1038
    %1041 = vrot.lane.b32.xlu0 %v1039, 64
    %v1042 = vpop.permute.xlu0 %1041
    %v1044 = vmul.f32 %v1027, %v1042
    %1046 = vrot.lane.b32.xlu0 %v1044, 32
    %v1047 = vpop.permute.xlu0 %1046
    %1050 = vrot.lane.b32.xlu0 %v926, 64
    %v1051 = vpop.permute.xlu0 %1050
    %v1053 = vsel %vm129, %v1047, %v1051
    %v1054 = vpack.c.bf16 %v1053, %v1053
    %v1056 = vsel %vm156, %v1054, 0
    %1058 = vmatprep.subr.bf16.mxu0 0
    %1059 = vmatpush1.bf16.msra.mxu0 %v259
    %1060 = vmatprep.subr.bf16.mxu0 0
    %1061 = vmatpush1.bf16.msra.mxu0 %v260
    %1062 = vmatprep.subr.bf16.mxu0 0
    %1063 = vmatpush1.bf16.msra.mxu0 %v261
    %1064 = vmatprep.subr.bf16.mxu0 0
    %1065 = vmatpush1.bf16.msra.mxu0 %v262
    %1066 = vmatprep.subr.bf16.mxu0 0
    %1067 = vmatpush1.bf16.msra.mxu0 0
    %1068 = vmatprep.subr.bf16.mxu0 0
    %1069 = vmatpush1.bf16.msra.mxu0 0
    %1070 = vmatprep.subr.bf16.mxu0 0
    %1071 = vmatpush1.bf16.msra.mxu0 0
    %1072 = vmatprep.subr.bf16.mxu0 0
    %1073 = vmatpush1.bf16.msra.mxu0 0
    %1074 = vmatprep.subr.bf16.mxu0 0
    %1075 = vmatpush1.bf16.msra.mxu0 0
    %1076 = vmatprep.subr.bf16.mxu0 0
    %1077 = vmatpush1.bf16.msra.mxu0 0
    %1078 = vmatprep.subr.bf16.mxu0 0
    %1079 = vmatpush1.bf16.msra.mxu0 0
    %1080 = vmatprep.subr.bf16.mxu0 0
    %1081 = vmatpush1.bf16.msra.mxu0 0
    %1082 = vmatprep.subr.bf16.mxu0 0
    %1083 = vmatpush1.bf16.msra.mxu0 0
    %1084 = vmatprep.subr.bf16.mxu0 0
    %1085 = vmatpush1.bf16.msra.mxu0 0
    %1086 = vmatprep.subr.bf16.mxu0 0
    %1087 = vmatpush1.bf16.msra.mxu0 0
    %1088 = vmatprep.subr.bf16.mxu0 0
    %1089 = vmatpush1.bf16.msra.mxu0 0
    %1090 = vmatprep.mubr.bf16.mxu0 0
    %1091 = vmatmul.mubr.bf16.gmra.mrb[0].mxu0 %v1056
    %v1092 = vpop.f32.mrb[0].mxu0
    %v1093 = vadd.f32 %v103, %v1092
    %v1094 = vpop.f32.mrb[0].mxu0
    %v1095 = vpop.f32.mrb[0].mxu0
    %v1096 = vpop.f32.mrb[0].mxu0
    %1097 = vdwg.mxu0
    %v1098 = vtanh.pop %v1093
    %v1099 = vmul.f32 %v1098, 0.5
    %v1100 = vadd.f32 %v1099, 0.5
    %v1101 = vsel %vm113, %v1098, %v1100
    %v1102 = vmul.f32 %v1101, %v920
    %1104 = vrot.lane.b32.xlu0 %v1101, 64
    %v1105 = vpop.permute.xlu0 %1104
    %v1107 = vmul.f32 %v1101, %v1105
    %1109 = vrot.lane.b32.xlu0 %v1107, 32
    %v1110 = vpop.permute.xlu0 %1109
    %v1112 = vadd.f32 %v1102, %v1110
    %v1113 = vtanh.pop %v1112
    %1115 = vrot.lane.b32.xlu0 %v1113, 64
    %v1116 = vpop.permute.xlu0 %1115
    %v1118 = vmul.f32 %v1101, %v1116
    %v1119 = vpack.c.bf16 %v1118, %v1118
    %1121 = vrot.lane.b32.xlu0 %v1119, 32
    %v1122 = vpop.permute.xlu0 %1121
    %v1124 = vsel %vm129, %v1122, 0
    %1126 = vmatprep.subr.bf16.mxu0 0
    %1127 = vmatpush1.bf16.msra.mxu0 %v351
    %1128 = vmatprep.subr.bf16.mxu0 0
    %1129 = vmatpush1.bf16.msra.mxu0 %v352
    %1130 = vmatprep.subr.bf16.mxu0 0
    %1131 = vmatpush1.bf16.msra.mxu0 0
    %1132 = vmatprep.subr.bf16.mxu0 0
    %1133 = vmatpush1.bf16.msra.mxu0 0
    %1134 = vmatprep.subr.bf16.mxu0 0
    %1135 = vmatpush1.bf16.msra.mxu0 0
    %1136 = vmatprep.subr.bf16.mxu0 0
    %1137 = vmatpush1.bf16.msra.mxu0 0
    %1138 = vmatprep.subr.bf16.mxu0 0
    %1139 = vmatpush1.bf16.msra.mxu0 0
    %1140 = vmatprep.subr.bf16.mxu0 0
    %1141 = vmatpush1.bf16.msra.mxu0 0
    %1142 = vmatprep.subr.bf16.mxu0 0
    %1143 = vmatpush1.bf16.msra.mxu0 0
    %1144 = vmatprep.subr.bf16.mxu0 0
    %1145 = vmatpush1.bf16.msra.mxu0 0
    %1146 = vmatprep.subr.bf16.mxu0 0
    %1147 = vmatpush1.bf16.msra.mxu0 0
    %1148 = vmatprep.subr.bf16.mxu0 0
    %1149 = vmatpush1.bf16.msra.mxu0 0
    %1150 = vmatprep.subr.bf16.mxu0 0
    %1151 = vmatpush1.bf16.msra.mxu0 0
    %1152 = vmatprep.subr.bf16.mxu0 0
    %1153 = vmatpush1.bf16.msra.mxu0 0
    %1154 = vmatprep.subr.bf16.mxu0 0
    %1155 = vmatpush1.bf16.msra.mxu0 0
    %1156 = vmatprep.subr.bf16.mxu0 0
    %1157 = vmatpush1.bf16.msra.mxu0 0
    %1158 = vmatprep.mubr.bf16.mxu0 0
    %1159 = vmatmul.mubr.bf16.gmra.mrb[0].mxu0 %v1124
    %v1160 = vpop.f32.mrb[0].mxu0
    %v1161 = vadd.f32 %v108, %v1160
    %v1162 = vpop.f32.mrb[0].mxu0
    %v1163 = vpop.f32.mrb[0].mxu0
    %v1164 = vpop.f32.mrb[0].mxu0
    %1165 = vdwg.mxu0
    %1166 = vst [vmem:[#allocation8 + $0x4] sm:$0x1] %v1161
    %v1167 = vld [vmem:[#allocation2 + $0x5] sm:$0x1]
    %1168 = vrot.lane.b32.xlu0 %v1044, 64
    %v1169 = vpop.permute.xlu0 %1168
    %v1171 = vsel %vm129, %v1167, %v1169
    %v1172 = vpack.c.bf16 %v1171, %v1171
    %v1174 = vsel %vm156, %v1172, 0
    %1176 = vmatprep.subr.bf16.mxu0 0
    %1177 = vmatpush1.bf16.msra.mxu0 %v148
    %1178 = vmatprep.subr.bf16.mxu0 0
    %1179 = vmatpush1.bf16.msra.mxu0 %v149
    %1180 = vmatprep.subr.bf16.mxu0 0
    %1181 = vmatpush1.bf16.msra.mxu0 %v150
    %1182 = vmatprep.subr.bf16.mxu0 0
    %1183 = vmatpush1.bf16.msra.mxu0 %v151
    %1184 = vmatprep.subr.bf16.mxu0 0
    %1185 = vmatpush1.bf16.msra.mxu0 0
    %1186 = vmatprep.subr.bf16.mxu0 0
    %1187 = vmatpush1.bf16.msra.mxu0 0
    %1188 = vmatprep.subr.bf16.mxu0 0
    %1189 = vmatpush1.bf16.msra.mxu0 0
    %1190 = vmatprep.subr.bf16.mxu0 0
    %1191 = vmatpush1.bf16.msra.mxu0 0
    %1192 = vmatprep.subr.bf16.mxu0 0
    %1193 = vmatpush1.bf16.msra.mxu0 0
    %1194 = vmatprep.subr.bf16.mxu0 0
    %1195 = vmatpush1.bf16.msra.mxu0 0
    %1196 = vmatprep.subr.bf16.mxu0 0
    %1197 = vmatpush1.bf16.msra.mxu0 0
    %1198 = vmatprep.subr.bf16.mxu0 0
    %1199 = vmatpush1.bf16.msra.mxu0 0
    %1200 = vmatprep.subr.bf16.mxu0 0
    %1201 = vmatpush1.bf16.msra.mxu0 0
    %1202 = vmatprep.subr.bf16.mxu0 0
    %1203 = vmatpush1.bf16.msra.mxu0 0
    %1204 = vmatprep.subr.bf16.mxu0 0
    %1205 = vmatpush1.bf16.msra.mxu0 0
    %1206 = vmatprep.subr.bf16.mxu0 0
    %1207 = vmatpush1.bf16.msra.mxu0 0
    %1208 = vmatprep.mubr.bf16.mxu0 0
    %1209 = vmatmul.mubr.bf16.gmra.mrb[0].mxu0 %v1174
    %v1210 = vpop.f32.mrb[0].mxu0
    %v1211 = vadd.f32 %v101, %v1210
    %v1212 = vpop.f32.mrb[0].mxu0
    %v1213 = vpop.f32.mrb[0].mxu0
    %v1214 = vpop.f32.mrb[0].mxu0
    %1215 = vdwg.mxu0
    %v1216 = vtanh.pop %v1211
    %v1217 = vmul.f32 %v1216, 0.5
    %v1218 = vadd.f32 %v1217, 0.5
    %v1219 = vsel %vm113, %v1216, %v1218
    %v1220 = vmul.f32 %v1219, %v1038
    %1222 = vrot.lane.b32.xlu0 %v1219, 64
    %v1223 = vpop.permute.xlu0 %1222
    %v1225 = vmul.f32 %v1219, %v1223
    %1227 = vrot.lane.b32.xlu0 %v1225, 32
    %v1228 = vpop.permute.xlu0 %1227
    %v1230 = vadd.f32 %v1220, %v1228
    %v1231 = vtanh.pop %v1230
    %1233 = vrot.lane.b32.xlu0 %v1231, 64
    %v1234 = vpop.permute.xlu0 %1233
    %v1236 = vmul.f32 %v1219, %v1234
    %1238 = vrot.lane.b32.xlu0 %v1236, 32
    %v1239 = vpop.permute.xlu0 %1238
    %1242 = vrot.lane.b32.xlu0 %v1118, 64
    %v1243 = vpop.permute.xlu0 %1242
    %v1245 = vsel %vm129, %v1239, %v1243
    %v1246 = vpack.c.bf16 %v1245, %v1245
    %v1248 = vsel %vm156, %v1246, 0
    %1250 = vmatprep.subr.bf16.mxu0 0
    %1251 = vmatpush1.bf16.msra.mxu0 %v259
    %1252 = vmatprep.subr.bf16.mxu0 0
    %1253 = vmatpush1.bf16.msra.mxu0 %v260
    %1254 = vmatprep.subr.bf16.mxu0 0
    %1255 = vmatpush1.bf16.msra.mxu0 %v261
    %1256 = vmatprep.subr.bf16.mxu0 0
    %1257 = vmatpush1.bf16.msra.mxu0 %v262
    %1258 = vmatprep.subr.bf16.mxu0 0
    %1259 = vmatpush1.bf16.msra.mxu0 0
    %1260 = vmatprep.subr.bf16.mxu0 0
    %1261 = vmatpush1.bf16.msra.mxu0 0
    %1262 = vmatprep.subr.bf16.mxu0 0
    %1263 = vmatpush1.bf16.msra.mxu0 0
    %1264 = vmatprep.subr.bf16.mxu0 0
    %1265 = vmatpush1.bf16.msra.mxu0 0
    %1266 = vmatprep.subr.bf16.mxu0 0
    %1267 = vmatpush1.bf16.msra.mxu0 0
    %1268 = vmatprep.subr.bf16.mxu0 0
    %1269 = vmatpush1.bf16.msra.mxu0 0
    %1270 = vmatprep.subr.bf16.mxu0 0
    %1271 = vmatpush1.bf16.msra.mxu0 0
    %1272 = vmatprep.subr.bf16.mxu0 0
    %1273 = vmatpush1.bf16.msra.mxu0 0
    %1274 = vmatprep.subr.bf16.mxu0 0
    %1275 = vmatpush1.bf16.msra.mxu0 0
    %1276 = vmatprep.subr.bf16.mxu0 0
    %1277 = vmatpush1.bf16.msra.mxu0 0
    %1278 = vmatprep.subr.bf16.mxu0 0
    %1279 = vmatpush1.bf16.msra.mxu0 0
    %1280 = vmatprep.subr.bf16.mxu0 0
    %1281 = vmatpush1.bf16.msra.mxu0 0
    %1282 = vmatprep.mubr.bf16.mxu0 0
    %1283 = vmatmul.mubr.bf16.gmra.mrb[0].mxu0 %v1248
    %v1284 = vpop.f32.mrb[0].mxu0
    %v1285 = vadd.f32 %v103, %v1284
    %v1286 = vpop.f32.mrb[0].mxu0
    %v1287 = vpop.f32.mrb[0].mxu0
    %v1288 = vpop.f32.mrb[0].mxu0
    %1289 = vdwg.mxu0
    %v1290 = vtanh.pop %v1285
    %v1291 = vmul.f32 %v1290, 0.5
    %v1292 = vadd.f32 %v1291, 0.5
    %v1293 = vsel %vm113, %v1290, %v1292
    %v1294 = vmul.f32 %v1293, %v1112
    %1296 = vrot.lane.b32.xlu0 %v1293, 64
    %v1297 = vpop.permute.xlu0 %1296
    %v1299 = vmul.f32 %v1293, %v1297
    %1301 = vrot.lane.b32.xlu0 %v1299, 32
    %v1302 = vpop.permute.xlu0 %1301
    %v1304 = vadd.f32 %v1294, %v1302
    %v1305 = vtanh.pop %v1304
    %1307 = vrot.lane.b32.xlu0 %v1305, 64
    %v1308 = vpop.permute.xlu0 %1307
    %v1310 = vmul.f32 %v1293, %v1308
    %v1311 = vpack.c.bf16 %v1310, %v1310
    %1313 = vrot.lane.b32.xlu0 %v1311, 32
    %v1314 = vpop.permute.xlu0 %1313
    %v1316 = vsel %vm129, %v1314, 0
    %1318 = vmatprep.subr.bf16.mxu0 0
    %1319 = vmatpush1.bf16.msra.mxu0 %v351
    %1320 = vmatprep.subr.bf16.mxu0 0
    %1321 = vmatpush1.bf16.msra.mxu0 %v352
    %1322 = vmatprep.subr.bf16.mxu0 0
    %1323 = vmatpush1.bf16.msra.mxu0 0
    %1324 = vmatprep.subr.bf16.mxu0 0
    %1325 = vmatpush1.bf16.msra.mxu0 0
    %1326 = vmatprep.subr.bf16.mxu0 0
    %1327 = vmatpush1.bf16.msra.mxu0 0
    %1328 = vmatprep.subr.bf16.mxu0 0
    %1329 = vmatpush1.bf16.msra.mxu0 0
    %1330 = vmatprep.subr.bf16.mxu0 0
    %1331 = vmatpush1.bf16.msra.mxu0 0
    %1332 = vmatprep.subr.bf16.mxu0 0
    %1333 = vmatpush1.bf16.msra.mxu0 0
    %1334 = vmatprep.subr.bf16.mxu0 0
    %1335 = vmatpush1.bf16.msra.mxu0 0
    %1336 = vmatprep.subr.bf16.mxu0 0
    %1337 = vmatpush1.bf16.msra.mxu0 0
    %1338 = vmatprep.subr.bf16.mxu0 0
    %1339 = vmatpush1.bf16.msra.mxu0 0
    %1340 = vmatprep.subr.bf16.mxu0 0
    %1341 = vmatpush1.bf16.msra.mxu0 0
    %1342 = vmatprep.subr.bf16.mxu0 0
    %1343 = vmatpush1.bf16.msra.mxu0 0
    %1344 = vmatprep.subr.bf16.mxu0 0
    %1345 = vmatpush1.bf16.msra.mxu0 0
    %1346 = vmatprep.subr.bf16.mxu0 0
    %1347 = vmatpush1.bf16.msra.mxu0 0
    %1348 = vmatprep.subr.bf16.mxu0 0
    %1349 = vmatpush1.bf16.msra.mxu0 0
    %1350 = vmatprep.mubr.bf16.mxu0 0
    %1351 = vmatmul.mubr.bf16.gmra.mrb[0].mxu0 %v1316
    %v1352 = vpop.f32.mrb[0].mxu0
    %v1353 = vadd.f32 %v108, %v1352
    %v1354 = vpop.f32.mrb[0].mxu0
    %v1355 = vpop.f32.mrb[0].mxu0
    %v1356 = vpop.f32.mrb[0].mxu0
    %1357 = vdwg.mxu0
    %1358 = vst [vmem:[#allocation8 + $0x5] sm:$0x1] %v1353
    %v1359 = vld [vmem:[#allocation2 + $0x6] sm:$0x1]
    %1360 = vrot.lane.b32.xlu0 %v1236, 64
    %v1361 = vpop.permute.xlu0 %1360
    %v1363 = vsel %vm129, %v1359, %v1361
    %v1364 = vpack.c.bf16 %v1363, %v1363
    %v1366 = vsel %vm156, %v1364, 0
    %1368 = vmatprep.subr.bf16.mxu0 0
    %1369 = vmatpush1.bf16.msra.mxu0 %v148
    %1370 = vmatprep.subr.bf16.mxu0 0
    %1371 = vmatpush1.bf16.msra.mxu0 %v149
    %1372 = vmatprep.subr.bf16.mxu0 0
    %1373 = vmatpush1.bf16.msra.mxu0 %v150
    %1374 = vmatprep.subr.bf16.mxu0 0
    %1375 = vmatpush1.bf16.msra.mxu0 %v151
    %1376 = vmatprep.subr.bf16.mxu0 0
    %1377 = vmatpush1.bf16.msra.mxu0 0
    %1378 = vmatprep.subr.bf16.mxu0 0
    %1379 = vmatpush1.bf16.msra.mxu0 0
    %1380 = vmatprep.subr.bf16.mxu0 0
    %1381 = vmatpush1.bf16.msra.mxu0 0
    %1382 = vmatprep.subr.bf16.mxu0 0
    %1383 = vmatpush1.bf16.msra.mxu0 0
    %1384 = vmatprep.subr.bf16.mxu0 0
    %1385 = vmatpush1.bf16.msra.mxu0 0
    %1386 = vmatprep.subr.bf16.mxu0 0
    %1387 = vmatpush1.bf16.msra.mxu0 0
    %1388 = vmatprep.subr.bf16.mxu0 0
    %1389 = vmatpush1.bf16.msra.mxu0 0
    %1390 = vmatprep.subr.bf16.mxu0 0
    %1391 = vmatpush1.bf16.msra.mxu0 0
    %1392 = vmatprep.subr.bf16.mxu0 0
    %1393 = vmatpush1.bf16.msra.mxu0 0
    %1394 = vmatprep.subr.bf16.mxu0 0
    %1395 = vmatpush1.bf16.msra.mxu0 0
    %1396 = vmatprep.subr.bf16.mxu0 0
    %1397 = vmatpush1.bf16.msra.mxu0 0
    %1398 = vmatprep.subr.bf16.mxu0 0
    %1399 = vmatpush1.bf16.msra.mxu0 0
    %1400 = vmatprep.mubr.bf16.mxu0 0
    %1401 = vmatmul.mubr.bf16.gmra.mrb[0].mxu0 %v1366
    %v1402 = vpop.f32.mrb[0].mxu0
    %v1403 = vadd.f32 %v101, %v1402
    %v1404 = vpop.f32.mrb[0].mxu0
    %v1405 = vpop.f32.mrb[0].mxu0
    %v1406 = vpop.f32.mrb[0].mxu0
    %1407 = vdwg.mxu0
    %v1408 = vtanh.pop %v1403
    %v1409 = vmul.f32 %v1408, 0.5
    %v1410 = vadd.f32 %v1409, 0.5
    %v1411 = vsel %vm113, %v1408, %v1410
    %v1412 = vmul.f32 %v1411, %v1230
    %1414 = vrot.lane.b32.xlu0 %v1411, 64
    %v1415 = vpop.permute.xlu0 %1414
    %v1417 = vmul.f32 %v1411, %v1415
    %1419 = vrot.lane.b32.xlu0 %v1417, 32
    %v1420 = vpop.permute.xlu0 %1419
    %v1422 = vadd.f32 %v1412, %v1420
    %v1423 = vtanh.pop %v1422
    %1425 = vrot.lane.b32.xlu0 %v1423, 64
    %v1426 = vpop.permute.xlu0 %1425
    %v1428 = vmul.f32 %v1411, %v1426
    %1430 = vrot.lane.b32.xlu0 %v1428, 32
    %v1431 = vpop.permute.xlu0 %1430
    %1434 = vrot.lane.b32.xlu0 %v1310, 64
    %v1435 = vpop.permute.xlu0 %1434
    %v1437 = vsel %vm129, %v1431, %v1435
    %v1438 = vpack.c.bf16 %v1437, %v1437
    %v1440 = vsel %vm156, %v1438, 0
    %1442 = vmatprep.subr.bf16.mxu0 0
    %1443 = vmatpush1.bf16.msra.mxu0 %v259
    %1444 = vmatprep.subr.bf16.mxu0 0
    %1445 = vmatpush1.bf16.msra.mxu0 %v260
    %1446 = vmatprep.subr.bf16.mxu0 0
    %1447 = vmatpush1.bf16.msra.mxu0 %v261
    %1448 = vmatprep.subr.bf16.mxu0 0
    %1449 = vmatpush1.bf16.msra.mxu0 %v262
    %1450 = vmatprep.subr.bf16.mxu0 0
    %1451 = vmatpush1.bf16.msra.mxu0 0
    %1452 = vmatprep.subr.bf16.mxu0 0
    %1453 = vmatpush1.bf16.msra.mxu0 0
    %1454 = vmatprep.subr.bf16.mxu0 0
    %1455 = vmatpush1.bf16.msra.mxu0 0
    %1456 = vmatprep.subr.bf16.mxu0 0
    %1457 = vmatpush1.bf16.msra.mxu0 0
    %1458 = vmatprep.subr.bf16.mxu0 0
    %1459 = vmatpush1.bf16.msra.mxu0 0
    %1460 = vmatprep.subr.bf16.mxu0 0
    %1461 = vmatpush1.bf16.msra.mxu0 0
    %1462 = vmatprep.subr.bf16.mxu0 0
    %1463 = vmatpush1.bf16.msra.mxu0 0
    %1464 = vmatprep.subr.bf16.mxu0 0
    %1465 = vmatpush1.bf16.msra.mxu0 0
    %1466 = vmatprep.subr.bf16.mxu0 0
    %1467 = vmatpush1.bf16.msra.mxu0 0
    %1468 = vmatprep.subr.bf16.mxu0 0
    %1469 = vmatpush1.bf16.msra.mxu0 0
    %1470 = vmatprep.subr.bf16.mxu0 0
    %1471 = vmatpush1.bf16.msra.mxu0 0
    %1472 = vmatprep.subr.bf16.mxu0 0
    %1473 = vmatpush1.bf16.msra.mxu0 0
    %1474 = vmatprep.mubr.bf16.mxu0 0
    %1475 = vmatmul.mubr.bf16.gmra.mrb[0].mxu0 %v1440
    %v1476 = vpop.f32.mrb[0].mxu0
    %v1477 = vadd.f32 %v103, %v1476
    %v1478 = vpop.f32.mrb[0].mxu0
    %v1479 = vpop.f32.mrb[0].mxu0
    %v1480 = vpop.f32.mrb[0].mxu0
    %1481 = vdwg.mxu0
    %v1482 = vtanh.pop %v1477
    %v1483 = vmul.f32 %v1482, 0.5
    %v1484 = vadd.f32 %v1483, 0.5
    %v1485 = vsel %vm113, %v1482, %v1484
    %v1486 = vmul.f32 %v1485, %v1304
    %1488 = vrot.lane.b32.xlu0 %v1485, 64
    %v1489 = vpop.permute.xlu0 %1488
    %v1491 = vmul.f32 %v1485, %v1489
    %1493 = vrot.lane.b32.xlu0 %v1491, 32
    %v1494 = vpop.permute.xlu0 %1493
    %v1496 = vadd.f32 %v1486, %v1494
    %v1497 = vtanh.pop %v1496
    %1499 = vrot.lane.b32.xlu0 %v1497, 64
    %v1500 = vpop.permute.xlu0 %1499
    %v1502 = vmul.f32 %v1485, %v1500
    %v1503 = vpack.c.bf16 %v1502, %v1502
    %1505 = vrot.lane.b32.xlu0 %v1503, 32
    %v1506 = vpop.permute.xlu0 %1505
    %v1508 = vsel %vm129, %v1506, 0
    %1510 = vmatprep.subr.bf16.mxu0 0
    %1511 = vmatpush1.bf16.msra.mxu0 %v351
    %1512 = vmatprep.subr.bf16.mxu0 0
    %1513 = vmatpush1.bf16.msra.mxu0 %v352
    %1514 = vmatprep.subr.bf16.mxu0 0
    %1515 = vmatpush1.bf16.msra.mxu0 0
    %1516 = vmatprep.subr.bf16.mxu0 0
    %1517 = vmatpush1.bf16.msra.mxu0 0
    %1518 = vmatprep.subr.bf16.mxu0 0
    %1519 = vmatpush1.bf16.msra.mxu0 0
    %1520 = vmatprep.subr.bf16.mxu0 0
    %1521 = vmatpush1.bf16.msra.mxu0 0
    %1522 = vmatprep.subr.bf16.mxu0 0
    %1523 = vmatpush1.bf16.msra.mxu0 0
    %1524 = vmatprep.subr.bf16.mxu0 0
    %1525 = vmatpush1.bf16.msra.mxu0 0
    %1526 = vmatprep.subr.bf16.mxu0 0
    %1527 = vmatpush1.bf16.msra.mxu0 0
    %1528 = vmatprep.subr.bf16.mxu0 0
    %1529 = vmatpush1.bf16.msra.mxu0 0
    %1530 = vmatprep.subr.bf16.mxu0 0
    %1531 = vmatpush1.bf16.msra.mxu0 0
    %1532 = vmatprep.subr.bf16.mxu0 0
    %1533 = vmatpush1.bf16.msra.mxu0 0
    %1534 = vmatprep.subr.bf16.mxu0 0
    %1535 = vmatpush1.bf16.msra.mxu0 0
    %1536 = vmatprep.subr.bf16.mxu0 0
    %1537 = vmatpush1.bf16.msra.mxu0 0
    %1538 = vmatprep.subr.bf16.mxu0 0
    %1539 = vmatpush1.bf16.msra.mxu0 0
    %1540 = vmatprep.subr.bf16.mxu0 0
    %1541 = vmatpush1.bf16.msra.mxu0 0
    %1542 = vmatprep.mubr.bf16.mxu0 0
    %1543 = vmatmul.mubr.bf16.gmra.mrb[0].mxu0 %v1508
    %v1544 = vpop.f32.mrb[0].mxu0
    %v1545 = vadd.f32 %v108, %v1544
    %v1546 = vpop.f32.mrb[0].mxu0
    %v1547 = vpop.f32.mrb[0].mxu0
    %v1548 = vpop.f32.mrb[0].mxu0
    %1549 = vdwg.mxu0
    %1550 = vst [vmem:[#allocation8 + $0x6] sm:$0x1] %v1545
    %v1551 = vld [vmem:[#allocation2 + $0x7] sm:$0x1]
    %1552 = vrot.lane.b32.xlu0 %v1428, 64
    %v1553 = vpop.permute.xlu0 %1552
    %v1555 = vsel %vm129, %v1551, %v1553
    %v1556 = vpack.c.bf16 %v1555, %v1555
    %v1558 = vsel %vm156, %v1556, 0
    %1560 = vmatprep.subr.bf16.mxu0 0
    %1561 = vmatpush1.bf16.msra.mxu0 %v148
    %1562 = vmatprep.subr.bf16.mxu0 0
    %1563 = vmatpush1.bf16.msra.mxu0 %v149
    %1564 = vmatprep.subr.bf16.mxu0 0
    %1565 = vmatpush1.bf16.msra.mxu0 %v150
    %1566 = vmatprep.subr.bf16.mxu0 0
    %1567 = vmatpush1.bf16.msra.mxu0 %v151
    %1568 = vmatprep.subr.bf16.mxu0 0
    %1569 = vmatpush1.bf16.msra.mxu0 0
    %1570 = vmatprep.subr.bf16.mxu0 0
    %1571 = vmatpush1.bf16.msra.mxu0 0
    %1572 = vmatprep.subr.bf16.mxu0 0
    %1573 = vmatpush1.bf16.msra.mxu0 0
    %1574 = vmatprep.subr.bf16.mxu0 0
    %1575 = vmatpush1.bf16.msra.mxu0 0
    %1576 = vmatprep.subr.bf16.mxu0 0
    %1577 = vmatpush1.bf16.msra.mxu0 0
    %1578 = vmatprep.subr.bf16.mxu0 0
    %1579 = vmatpush1.bf16.msra.mxu0 0
    %1580 = vmatprep.subr.bf16.mxu0 0
    %1581 = vmatpush1.bf16.msra.mxu0 0
    %1582 = vmatprep.subr.bf16.mxu0 0
    %1583 = vmatpush1.bf16.msra.mxu0 0
    %1584 = vmatprep.subr.bf16.mxu0 0
    %1585 = vmatpush1.bf16.msra.mxu0 0
    %1586 = vmatprep.subr.bf16.mxu0 0
    %1587 = vmatpush1.bf16.msra.mxu0 0
    %1588 = vmatprep.subr.bf16.mxu0 0
    %1589 = vmatpush1.bf16.msra.mxu0 0
    %1590 = vmatprep.subr.bf16.mxu0 0
    %1591 = vmatpush1.bf16.msra.mxu0 0
    %1592 = vmatprep.mubr.bf16.mxu0 0
    %1593 = vmatmul.mubr.bf16.gmra.mrb[0].mxu0 %v1558
    %v1594 = vpop.f32.mrb[0].mxu0
    %v1595 = vadd.f32 %v101, %v1594
    %v1596 = vpop.f32.mrb[0].mxu0
    %v1597 = vpop.f32.mrb[0].mxu0
    %v1598 = vpop.f32.mrb[0].mxu0
    %1599 = vdwg.mxu0
    %v1600 = vtanh.pop %v1595
    %v1601 = vmul.f32 %v1600, 0.5
    %v1602 = vadd.f32 %v1601, 0.5
    %v1603 = vsel %vm113, %v1600, %v1602
    %v1604 = vmul.f32 %v1603, %v1422
    %1606 = vrot.lane.b32.xlu0 %v1603, 64
    %v1607 = vpop.permute.xlu0 %1606
    %v1609 = vmul.f32 %v1603, %v1607
    %1611 = vrot.lane.b32.xlu0 %v1609, 32
    %v1612 = vpop.permute.xlu0 %1611
    %v1614 = vadd.f32 %v1604, %v1612
    %v1615 = vtanh.pop %v1614
    %1617 = vrot.lane.b32.xlu0 %v1615, 64
    %v1618 = vpop.permute.xlu0 %1617
    %v1620 = vmul.f32 %v1603, %v1618
    %1622 = vrot.lane.b32.xlu0 %v1620, 32
    %v1623 = vpop.permute.xlu0 %1622
    %1626 = vrot.lane.b32.xlu0 %v1502, 64
    %v1627 = vpop.permute.xlu0 %1626
    %v1629 = vsel %vm129, %v1623, %v1627
    %v1630 = vpack.c.bf16 %v1629, %v1629
    %v1632 = vsel %vm156, %v1630, 0
    %1634 = vmatprep.subr.bf16.mxu0 0
    %1635 = vmatpush1.bf16.msra.mxu0 %v259
    %1636 = vmatprep.subr.bf16.mxu0 0
    %1637 = vmatpush1.bf16.msra.mxu0 %v260
    %1638 = vmatprep.subr.bf16.mxu0 0
    %1639 = vmatpush1.bf16.msra.mxu0 %v261
    %1640 = vmatprep.subr.bf16.mxu0 0
    %1641 = vmatpush1.bf16.msra.mxu0 %v262
    %1642 = vmatprep.subr.bf16.mxu0 0
    %1643 = vmatpush1.bf16.msra.mxu0 0
    %1644 = vmatprep.subr.bf16.mxu0 0
    %1645 = vmatpush1.bf16.msra.mxu0 0
    %1646 = vmatprep.subr.bf16.mxu0 0
    %1647 = vmatpush1.bf16.msra.mxu0 0
    %1648 = vmatprep.subr.bf16.mxu0 0
    %1649 = vmatpush1.bf16.msra.mxu0 0
    %1650 = vmatprep.subr.bf16.mxu0 0
    %1651 = vmatpush1.bf16.msra.mxu0 0
    %1652 = vmatprep.subr.bf16.mxu0 0
    %1653 = vmatpush1.bf16.msra.mxu0 0
    %1654 = vmatprep.subr.bf16.mxu0 0
    %1655 = vmatpush1.bf16.msra.mxu0 0
    %1656 = vmatprep.subr.bf16.mxu0 0
    %1657 = vmatpush1.bf16.msra.mxu0 0
    %1658 = vmatprep.subr.bf16.mxu0 0
    %1659 = vmatpush1.bf16.msra.mxu0 0
    %1660 = vmatprep.subr.bf16.mxu0 0
    %1661 = vmatpush1.bf16.msra.mxu0 0
    %1662 = vmatprep.subr.bf16.mxu0 0
    %1663 = vmatpush1.bf16.msra.mxu0 0
    %1664 = vmatprep.subr.bf16.mxu0 0
    %1665 = vmatpush1.bf16.msra.mxu0 0
    %1666 = vmatprep.mubr.bf16.mxu0 0
    %1667 = vmatmul.mubr.bf16.gmra.mrb[0].mxu0 %v1632
    %v1668 = vpop.f32.mrb[0].mxu0
    %v1669 = vadd.f32 %v103, %v1668
    %v1670 = vpop.f32.mrb[0].mxu0
    %v1671 = vpop.f32.mrb[0].mxu0
    %v1672 = vpop.f32.mrb[0].mxu0
    %1673 = vdwg.mxu0
    %v1674 = vtanh.pop %v1669
    %v1675 = vmul.f32 %v1674, 0.5
    %v1676 = vadd.f32 %v1675, 0.5
    %v1677 = vsel %vm113, %v1674, %v1676
    %v1678 = vmul.f32 %v1677, %v1496
    %1680 = vrot.lane.b32.xlu0 %v1677, 64
    %v1681 = vpop.permute.xlu0 %1680
    %v1683 = vmul.f32 %v1677, %v1681
    %1685 = vrot.lane.b32.xlu0 %v1683, 32
    %v1686 = vpop.permute.xlu0 %1685
    %v1688 = vadd.f32 %v1678, %v1686
    %v1689 = vtanh.pop %v1688
    %1691 = vrot.lane.b32.xlu0 %v1689, 64
    %v1692 = vpop.permute.xlu0 %1691
    %v1694 = vmul.f32 %v1677, %v1692
    %v1695 = vpack.c.bf16 %v1694, %v1694
    %1697 = vrot.lane.b32.xlu0 %v1695, 32
    %v1698 = vpop.permute.xlu0 %1697
    %v1700 = vsel %vm129, %v1698, 0
    %1702 = vmatprep.subr.bf16.mxu0 0
    %1703 = vmatpush1.bf16.msra.mxu0 %v351
    %1704 = vmatprep.subr.bf16.mxu0 0
    %1705 = vmatpush1.bf16.msra.mxu0 %v352
    %1706 = vmatprep.subr.bf16.mxu0 0
    %1707 = vmatpush1.bf16.msra.mxu0 0
    %1708 = vmatprep.subr.bf16.mxu0 0
    %1709 = vmatpush1.bf16.msra.mxu0 0
    %1710 = vmatprep.subr.bf16.mxu0 0
    %1711 = vmatpush1.bf16.msra.mxu0 0
    %1712 = vmatprep.subr.bf16.mxu0 0
    %1713 = vmatpush1.bf16.msra.mxu0 0
    %1714 = vmatprep.subr.bf16.mxu0 0
    %1715 = vmatpush1.bf16.msra.mxu0 0
    %1716 = vmatprep.subr.bf16.mxu0 0
    %1717 = vmatpush1.bf16.msra.mxu0 0
    %1718 = vmatprep.subr.bf16.mxu0 0
    %1719 = vmatpush1.bf16.msra.mxu0 0
    %1720 = vmatprep.subr.bf16.mxu0 0
    %1721 = vmatpush1.bf16.msra.mxu0 0
    %1722 = vmatprep.subr.bf16.mxu0 0
    %1723 = vmatpush1.bf16.msra.mxu0 0
    %1724 = vmatprep.subr.bf16.mxu0 0
    %1725 = vmatpush1.bf16.msra.mxu0 0
    %1726 = vmatprep.subr.bf16.mxu0 0
    %1727 = vmatpush1.bf16.msra.mxu0 0
    %1728 = vmatprep.subr.bf16.mxu0 0
    %1729 = vmatpush1.bf16.msra.mxu0 0
    %1730 = vmatprep.subr.bf16.mxu0 0
    %1731 = vmatpush1.bf16.msra.mxu0 0
    %1732 = vmatprep.subr.bf16.mxu0 0
    %1733 = vmatpush1.bf16.msra.mxu0 0
    %1734 = vmatprep.mubr.bf16.mxu0 0
    %1735 = vmatmul.mubr.bf16.gmra.mrb[0].mxu0 %v1700
    %v1736 = vpop.f32.mrb[0].mxu0
    %v1737 = vadd.f32 %v108, %v1736
    %v1738 = vpop.f32.mrb[0].mxu0
    %v1739 = vpop.f32.mrb[0].mxu0
    %v1740 = vpop.f32.mrb[0].mxu0
    %1741 = vdwg.mxu0
    %1742 = vst [vmem:[#allocation8 + $0x7] sm:$0x1] %v1737
    %vm1743 = vcmask 253952
    %1744 = vst.msk [vmem:[#allocation9] sm:$0x1] %vm1743, %v1623
    %1746 = vrot.lane.b32.xlu0 %v1614, 96
    %v1747 = vpop.permute.xlu0 %1746
    %1749 = vst.msk [vmem:[#allocation11] sm:$0x1] %vm1743, %v1747
    %1751 = vrot.lane.b32.xlu0 %v1694, 32
    %v1752 = vpop.permute.xlu0 %1751
    %1754 = vst.msk [vmem:[%s115] sm:$0x1] %vm1743, %v1752
    %1756 = vrot.lane.b32.xlu0 %v1688, 96
    %v1757 = vpop.permute.xlu0 %1756
    %1759 = vst.msk [vmem:[%s118] sm:$0x1] %vm1743, %v1757
    // Predicated region
    $region46: #{tpu_custom_call.1} parent=1 // pred_check
      _
    $region47: #{tpu_custom_call.1} parent=1 // pred_check_branch
      %1761 = sbr.rel (0) target = $region49
    $region48: #{tpu_custom_call.1} parent=1 // pred_region
      %s1763 = ssub.s32 128, 128
      %1764 = vsyncadd [#allocation4], %s1763
      %s1766 = sshll.u32 [#allocation8], 4
      %s1767 = int_to_ptr.vmem [resolvable:$true] %s1766
      %1769 = dma.vmem_to_hbm [thread:$0]  %s1767, 128, %s7, [#allocation4]
    $region49: #{tpu_custom_call.1} parent=1 // pred_fallthru
      _
    // Predicated region
    $region50: #{tpu_custom_call.1} parent=1 // pred_check
      _
    $region51: #{tpu_custom_call.1} parent=1 // pred_check_branch
      %1771 = sbr.rel (0) target = $region53
    $region52: #{tpu_custom_call.1} parent=1 // pred_region
      %s1773 = ssub.s32 32, 32
      %1774 = vsyncadd [#allocation10], %s1773
      %s1775 = sshll.u32 [#allocation9], 4
      %s1776 = int_to_ptr.vmem [resolvable:$true] %s1775
      %1781 = dma.vmem_to_hbm [thread:$0]  %s1776, 32, %s8, [#allocation10], 16, 16, 1
    $region53: #{tpu_custom_call.1} parent=1 // pred_fallthru
      _
    // Predicated region
    $region54: #{tpu_custom_call.1} parent=1 // pred_check
      _
    $region55: #{tpu_custom_call.1} parent=1 // pred_check_branch
      %1783 = sbr.rel (0) target = $region57
    $region56: #{tpu_custom_call.1} parent=1 // pred_region
      %s1785 = ssub.s32 32, 32
      %1786 = vsyncadd [#allocation10], %s1785
      %s1787 = sshll.u32 [#allocation11], 4
      %s1788 = int_to_ptr.vmem [resolvable:$true] %s1787
      %1793 = dma.vmem_to_hbm [thread:$0]  %s1788, 32, %s9, [#allocation10], 16, 16, 1
    $region57: #{tpu_custom_call.1} parent=1 // pred_fallthru
      _
    // Predicated region
    $region58: #{tpu_custom_call.1} parent=1 // pred_check
      _
    $region59: #{tpu_custom_call.1} parent=1 // pred_check_branch
      %1795 = sbr.rel (0) target = $region61
    $region60: #{tpu_custom_call.1} parent=1 // pred_region
      %1796 = dma.done [#allocation4], 128
    $region61: #{tpu_custom_call.1} parent=1 // pred_fallthru
      _
    // Predicated region
    $region62: #{tpu_custom_call.1} parent=1 // pred_check
      _
    $region63: #{tpu_custom_call.1} parent=1 // pred_check_branch
      %1798 = sbr.rel (0) target = $region65
    $region64: #{tpu_custom_call.1} parent=1 // pred_region
      %1799 = dma.done [#allocation10], 32
    $region65: #{tpu_custom_call.1} parent=1 // pred_fallthru
      _
    // Predicated region
    $region66: #{tpu_custom_call.1} parent=1 // pred_check
      _
    $region67: #{tpu_custom_call.1} parent=1 // pred_check_branch
      %1801 = sbr.rel (0) target = $region69
    $region68: #{tpu_custom_call.1} parent=1 // pred_region
      %1802 = dma.done [#allocation10], 32
    $region69: #{tpu_custom_call.1} parent=1 // pred_fallthru
      _
    %1803 = vsyncpa [#allocation3], 1
    %1804 = vsyncpa [#allocation6], 1
    %1805 = vsyncpa [#allocation4], 1
    %1806 = vsyncpa [#allocation10], 1

</llo_original>
